<compile_context>
chip_gen: v5e
topology: v5e:2x2
jax: 0.10.0
libtpu: 0.0.40
codegen_flags: <defaults>
</compile_context>

<pallas_src>
import functools
import math

import jax
import jax.numpy as jnp
from jax.experimental import pallas as pl
from jax.experimental.pallas import tpu as pltpu

EPS = 1e-5
_HIGH = jax.lax.Precision.HIGHEST


def _round_up(x, m):
    return (x + m - 1) // m * m


def _default_vmem_limit():
    """Per-generation VMEM limit: v5e/v6e have 128 MiB physical, v7x 64 MiB."""
    try:
        phys = int(pltpu.get_tpu_info().vmem_capacity_bytes)
    except Exception:  # query unavailable -> conservative cross-generation value
        phys = 64 * 1024 * 1024
    return int(max(min(phys - (16 << 20), 112 << 20), 32 << 20))


def _auto_tile_e(n_edges, n_drug_p, n_dis_p, h1, h2, vmem_limit_bytes, max_tile=8192):
    """Largest 128-aligned edge tile that fits the VMEM budget (amortizes grid-step cost)."""
    # f32 per-edge VMEM: one-hot selection intermediates, activations through the MLP,
    # the (1, tile) score slab, and the double-buffered (2, tile) int32 index tile.
    per_edge = 4 * (n_drug_p + n_dis_p + 2 * (h1 + h2) + 1) + 2 * 2 * 4
    budget = max(int(vmem_limit_bytes) // 2, 2 << 20)   # headroom for tables / pipelining
    tile = min(budget // per_edge, max_tile)
    tile = max(128, (tile // 128) * 128)
    return int(min(tile, _round_up(n_edges, 128)))


# -----------------------------------------------------------------------------
# Fused multi-phase kernel (transposed layout: features on sublanes, edges on lanes).
#   phase 0: accumulate BN1 batch sum / sum-of-squares of z1 = W1-part of Linear1 (no bias)
#   phase 1: finalize BN1 affine, accumulate BN2 stats of z2 = W2 @ relu(BN1(z1))
#   phase 2: finalize BN2 affine, compute sigmoid(L3(relu(BN2(z2)))) per edge tile
# Bias folding: BatchNorm is shift-invariant in variance and the bias cancels in the shift,
# so computing stats/normalization on the bias-free z is exactly equivalent.
# -----------------------------------------------------------------------------

def _fused_mlp_kernel(idx_ref, t1d_ref, t1s_ref, w2t_ref, g1_ref, be1_ref, g2_ref, be2_ref,
                      w3_ref, b3_ref, out_ref,
                      sum1, sq1, sum2, sq2, s1, o1, s2, o2,
                      *, n_edges, tile_e, inv_e):
    phase = pl.program_id(0)
    tile = pl.program_id(1)

    @pl.when((phase == 0) & (tile == 0))
    def _init_bn1_acc():
        sum1[...] = jnp.zeros_like(sum1)
        sq1[...] = jnp.zeros_like(sq1)

    @pl.when((phase == 1) & (tile == 0))
    def _finalize_bn1_init_bn2():
        mean = sum1[...] * inv_e
        var = jnp.maximum(sq1[...] * inv_e - mean * mean, 0.0)   # biased var; clamp guards cancellation
        sc = g1_ref[...] * jax.lax.rsqrt(var + EPS)              # EUP rsqrt
        s1[...] = sc
        o1[...] = be1_ref[...] - mean * sc
        sum2[...] = jnp.zeros_like(sum2)
        sq2[...] = jnp.zeros_like(sq2)

    @pl.when((phase == 2) & (tile == 0))
    def _finalize_bn2():
        mean = sum2[...] * inv_e
        var = jnp.maximum(sq2[...] * inv_e - mean * mean, 0.0)
        sc = g2_ref[...] * jax.lax.rsqrt(var + EPS)
        s2[...] = sc
        o2[...] = be2_ref[...] - mean * sc

    # --- fused gather + concat + Linear1 (bias-free) via two disjoint one-hot matmuls ---
    idx = idx_ref[...]                                            # (2, tile_e) int32
    src = idx[0:1, :]                                             # (1, tile_e) drug row ids
    dst = idx[1:2, :]                                             # (1, tile_e) disease row ids
    n_dp = t1d_ref.shape[1]
    n_sp = t1s_ref.shape[1]
    oh_d = (jax.lax.broadcasted_iota(jnp.int32, (n_dp, tile_e), 0) == src).astype(jnp.float32)
    oh_s = (jax.lax.broadcasted_iota(jnp.int32, (n_sp, tile_e), 0) == dst).astype(jnp.float32)
    z1 = (jnp.dot(t1d_ref[...], oh_d, preferred_element_type=jnp.float32)
          + jnp.dot(t1s_ref[...], oh_s, preferred_element_type=jnp.float32))   # (h1, tile_e)

    # 1/0 mask of the lanes in this tile that are real (non-padded) edges.
    lane = tile * tile_e + jax.lax.broadcasted_iota(jnp.int32, (1, tile_e), 1)
    valid = (lane < n_edges).astype(jnp.float32)

    @pl.when(phase == 0)
    def _accumulate_bn1():
        zm = z1 * valid
        sum1[...] += jnp.sum(zm, axis=1, keepdims=True)
        sq1[...] += jnp.sum(zm * zm, axis=1, keepdims=True)

    @pl.when(phase == 1)
    def _accumulate_bn2():
        a1 = jnp.maximum(z1 * s1[...] + o1[...], 0.0)             # BN1 + ReLU
        z2 = jnp.dot(w2t_ref[...], a1, preferred_element_type=jnp.float32)   # bias folded away
        zm = z2 * valid
        sum2[...] += jnp.sum(zm, axis=1, keepdims=True)
        sq2[...] += jnp.sum(zm * zm, axis=1, keepdims=True)

    @pl.when(phase == 2)
    def _score():
        a1 = jnp.maximum(z1 * s1[...] + o1[...], 0.0)             # (h1, tile_e)
        z2 = jnp.dot(w2t_ref[...], a1, preferred_element_type=jnp.float32)
        a2 = jnp.maximum(z2 * s2[...] + o2[...], 0.0)             # (h2, tile_e)
        # Linear(h2 -> 1): VPU multiply + sublane reduction; edges stay on lanes so the
        # (1, 1, tile_e) output block is written with unmasked, lane-dense stores.
        z3 = jnp.sum(a2 * w3_ref[...], axis=0, keepdims=True) + b3_ref[...]   # (1, tile_e)
        out_ref[0, :, :] = jax.nn.sigmoid(z3)


# -----------------------------------------------------------------------------
# Host-side wrappers.
# -----------------------------------------------------------------------------

def mlp_predictor_scores(params, src_idx, dst_idx, drug_tbl, dis_tbl, *,
                         tile_e=None, vmem_limit_bytes=None):
    """MLPPredictor head over the edge set. Returns (E,) scores in [0, 1]."""
    n_drug, f_node = drug_tbl.shape
    n_dis = dis_tbl.shape[0]
    n_edges = int(src_idx.shape[0])
    h_feats = 2 * f_node
    h1, h2 = h_feats // 2, h_feats // 4

    if vmem_limit_bytes is None:
        vmem_limit_bytes = _default_vmem_limit()

    # Fold Linear-1 into per-node gather tables: concat(a, b) @ W1 == a @ W1_top + b @ W1_bot.
    # The bias b1 is folded into the BN1 affine inside the kernel, so it is dropped here.
    w1 = params["w1"]
    t1d = jnp.dot(drug_tbl, w1[:f_node], precision=_HIGH).T       # (h1, n_drug)
    t1s = jnp.dot(dis_tbl, w1[f_node:], precision=_HIGH).T        # (h1, n_dis)
    n_drug_p = _round_up(n_drug, 8)
    n_dis_p = _round_up(n_dis, 8)
    t1d = jnp.pad(t1d, ((0, 0), (0, n_drug_p - n_drug)))
    t1s = jnp.pad(t1s, ((0, 0), (0, n_dis_p - n_dis)))

    w2t = params["w2"].T                                          # (h2, h1); b2 folded away
    g1c = params["g1"].reshape(h1, 1)
    be1c = params["be1"].reshape(h1, 1)
    g2c = params["g2"].reshape(h2, 1)
    be2c = params["be2"].reshape(h2, 1)
    w3c = params["w3"].reshape(h2, 1)
    b3c = params["b3"].reshape(1, 1)

    # Edge tiling: largest 128-aligned tile fitting the VMEM budget unless overridden.
    if tile_e is None:
        tile_e = _auto_tile_e(n_edges, n_drug_p, n_dis_p, h1, h2, vmem_limit_bytes)
    else:
        tile_e = max(128, _round_up(int(tile_e), 128))
        tile_e = min(tile_e, _round_up(n_edges, 128))
    e_pad = _round_up(n_edges, tile_e)
    num_tiles = e_pad // tile_e

    idx = jnp.zeros((2, e_pad), jnp.int32)                        # padded edges -> node 0
    idx = idx.at[0, :n_edges].set(src_idx.astype(jnp.int32))
    idx = idx.at[1, :n_edges].set(dst_idx.astype(jnp.int32))

    idx_spec = pl.BlockSpec((2, tile_e), lambda p, i: (0, i))

    def full_spec(a):
        return pl.BlockSpec(a.shape, lambda p, i, _nd=a.ndim: (0,) * _nd)

    scores = pl.pallas_call(
        functools.partial(_fused_mlp_kernel, n_edges=n_edges, tile_e=tile_e,
                          inv_e=1.0 / n_edges),
        grid=(3, num_tiles),                                      # (phase, edge tile)
        in_specs=[idx_spec, full_spec(t1d), full_spec(t1s), full_spec(w2t),
                  full_spec(g1c), full_spec(be1c), full_spec(g2c), full_spec(be2c),
                  full_spec(w3c), full_spec(b3c)],
        out_specs=pl.BlockSpec((1, 1, tile_e), lambda p, i: (i, 0, 0)),
        out_shape=jax.ShapeDtypeStruct((num_tiles, 1, tile_e), jnp.float32),
        scratch_shapes=[
            pltpu.VMEM((h1, 1), jnp.float32),   # sum1
            pltpu.VMEM((h1, 1), jnp.float32),   # sumsq1
            pltpu.VMEM((h2, 1), jnp.float32),   # sum2
            pltpu.VMEM((h2, 1), jnp.float32),   # sumsq2
            pltpu.VMEM((h1, 1), jnp.float32),   # BN1 scale
            pltpu.VMEM((h1, 1), jnp.float32),   # BN1 shift
            pltpu.VMEM((h2, 1), jnp.float32),   # BN2 scale
            pltpu.VMEM((h2, 1), jnp.float32),   # BN2 shift
        ],
        compiler_params=pltpu.CompilerParams(
            # Phase axis carries the BN-stat dependency and the edge-tile axis feeds the
            # global accumulators, so both must stay sequential on one core.
            dimension_semantics=("arbitrary", "arbitrary"),
            vmem_limit_bytes=int(vmem_limit_bytes)),
    )(idx, t1d, t1s, w2t, g1c, be1c, g2c, be2c, w3c, b3c)

    return scores.reshape(-1)[:n_edges]                           # squeeze(1)


def _conv_node_tables(params, src_idx, dst_idx, h_drug, d_disease):
    """DGL GraphConv(norm='both', allow_zero_in_degree=True) over Drug->Disease edges.
    Plain-JAX glue (sparse scatter-add); returns the post-conv node tables."""
    n_drug, dim = h_drug.shape
    n_dis = d_disease.shape[0]
    feat = jnp.concatenate([
        jnp.concatenate([h_drug, jnp.zeros((n_drug, dim), h_drug.dtype)], axis=1),
        jnp.concatenate([jnp.zeros((n_dis, dim), d_disease.dtype), d_disease], axis=1),
    ], axis=0)                                                    # (n_nodes, 2*dim)
    src = src_idx.astype(jnp.int32)
    dst = dst_idx.astype(jnp.int32) + n_drug                      # homogeneous node ids
    n_nodes = n_drug + n_dis
    ones = jnp.ones(src.shape, jnp.float32)
    out_deg = jnp.zeros((n_nodes,), jnp.float32).at[src].add(ones)
    in_deg = jnp.zeros((n_nodes,), jnp.float32).at[dst].add(ones)
    src_norm = jax.lax.rsqrt(jnp.maximum(out_deg, 1.0))           # degrees clamped to 1
    dst_norm = jax.lax.rsqrt(jnp.maximum(in_deg, 1.0))
    msg = (feat * src_norm[:, None])[src]
    agg = jnp.zeros_like(feat).at[dst].add(msg)
    rst = agg * dst_norm[:, None]
    feature = jnp.dot(rst, params["conv_w"], precision=_HIGH) + params["conv_b"]
    return feature[:n_drug], feature[n_drug:]


def gcn_predictor_forward(params, src_idx, dst_idx, h_drug, d_disease, *,
                          tile_e=None, vmem_limit_bytes=None):
    """GCNPredictor.forward over the ('Drug', 'treath', 'Disease') edge set."""
    drug_tbl, dis_tbl = _conv_node_tables(params, src_idx, dst_idx, h_drug, d_disease)
    return mlp_predictor_scores(params, src_idx, dst_idx, drug_tbl, dis_tbl,
                                tile_e=tile_e, vmem_limit_bytes=vmem_limit_bytes)


def init_params(key, dim):
    """Deterministic init matching GCNPredictor(dim) layer shapes."""
    h_feats = 4 * dim
    h1, h2 = h_feats // 2, h_feats // 4
    kcw, kcb, k1, k2, k3 = jax.random.split(key, 5)

    def linear(k, fi, fo):
        kw, kb = jax.random.split(k)
        bound = 1.0 / math.sqrt(fi)
        w = jax.random.uniform(kw, (fi, fo), jnp.float32, -bound, bound)
        b = jax.random.uniform(kb, (fo,), jnp.float32, -bound, bound)
        return w, b

    w1, b1 = linear(k1, h_feats, h1)
    w2, b2 = linear(k2, h1, h2)
    w3, b3 = linear(k3, h2, 1)
    xav = math.sqrt(6.0 / (4 * dim))                              # xavier_uniform
    conv_w = jax.random.uniform(kcw, (2 * dim, 2 * dim), jnp.float32, -xav, xav)
    # Small nonzero conv bias so the (zero-in-degree) drug features still exercise the
    # src side of the fused gather.
    conv_b = 0.1 * jax.random.normal(kcb, (2 * dim,), jnp.float32)
    return {
        "conv_w": conv_w, "conv_b": conv_b,
        "w1": w1, "b1": b1,
        "g1": jnp.ones((h1,), jnp.float32), "be1": jnp.zeros((h1,), jnp.float32),
        "w2": w2, "b2": b2,
        "g2": jnp.ones((h2,), jnp.float32), "be2": jnp.zeros((h2,), jnp.float32),
        "w3": w3, "b3": b3,
    }


def _mlp_reference(params, src_idx, dst_idx, drug_tbl, dis_tbl):
    """Pure-JAX reference of the MLPPredictor head (training-mode BatchNorm, with biases)."""
    h = jnp.concatenate([drug_tbl[src_idx], dis_tbl[dst_idx]], axis=1)

    def bn(z, g, b):
        m = jnp.mean(z, axis=0)
        v = jnp.mean((z - m) ** 2, axis=0)
        return g * (z - m) * jax.lax.rsqrt(v + EPS) + b

    z = jnp.dot(h, params["w1"], precision=_HIGH) + params["b1"]
    z = jnp.maximum(bn(z, params["g1"], params["be1"]), 0.0)
    z = jnp.dot(z, params["w2"], precision=_HIGH) + params["b2"]
    z = jnp.maximum(bn(z, params["g2"], params["be2"]), 0.0)
    z = jnp.dot(z, params["w3"], precision=_HIGH) + params["b3"]
    return jax.nn.sigmoid(z)[:, 0]


if __name__ == "__main__":
    dim = 8                                   # conv width 16, MLP h_feats 32 -> 16 -> 8 -> 1
    n_drugs, n_diseases, n_edges = 24, 17, 1000

    key = jax.random.PRNGKey(0)
    kp, kd, ks, ke1, ke2 = jax.random.split(key, 5)
    params = init_params(kp, dim)
    h_drug = jax.random.normal(kd, (n_drugs, dim), jnp.float32)
    d_disease = jax.random.normal(ks, (n_diseases, dim), jnp.float32)
    src_idx = jax.random.randint(ke1, (n_edges,), 0, n_drugs)
    dst_idx = jax.random.randint(ke2, (n_edges,), 0, n_diseases)

    # Pure-JAX reference of the same forward pass.
    drug_tbl, dis_tbl = _conv_node_tables(params, src_idx, dst_idx, h_drug, d_disease)
    ref = _mlp_reference(params, src_idx, dst_idx, drug_tbl, dis_tbl)

    # Default path: auto-derived (large) edge tile -> a single tile at this size.
    scores = gcn_predictor_forward(params, src_idx, dst_idx, h_drug, d_disease)
    scores = jax.block_until_ready(scores)

    # Multi-tile path: small explicit tile so the global-BN accumulation across tiles and
    # the masked ragged tail are exercised too.
    scores_mt = gcn_predictor_forward(params, src_idx, dst_idx, h_drug, d_disease, tile_e=256)
    scores_mt = jax.block_until_ready(scores_mt)

    for s in (scores, scores_mt):
        assert s.shape == (n_edges,)
        assert bool(jnp.all(jnp.isfinite(s)))
        assert bool(jnp.all((s >= 0.0) & (s <= 1.0)))
        err = float(jnp.max(jnp.abs(s - ref)))
        assert err < 2e-3, f"max |pallas - reference| = {err}"
    print("KERNEL_OK")
</pallas_src>

<mosaic_0001>
module attributes {stable_mosaic.version = 11 : i64} {
  func.func @_fused_mlp_kernel(%arg0: i32, %arg1: i32, %arg2: memref<2x1024xi32, #tpu.memory_space<vmem>>, %arg3: memref<16x24xf32, #tpu.memory_space<vmem>>, %arg4: memref<16x24xf32, #tpu.memory_space<vmem>>, %arg5: memref<8x16xf32, #tpu.memory_space<vmem>>, %arg6: memref<16x1xf32, #tpu.memory_space<vmem>>, %arg7: memref<16x1xf32, #tpu.memory_space<vmem>>, %arg8: memref<8x1xf32, #tpu.memory_space<vmem>>, %arg9: memref<8x1xf32, #tpu.memory_space<vmem>>, %arg10: memref<8x1xf32, #tpu.memory_space<vmem>>, %arg11: memref<1x1xf32, #tpu.memory_space<vmem>>, %arg12: memref<1x1x1024xf32, #tpu.memory_space<vmem>>, %arg13: memref<16x1xf32, #tpu.memory_space<vmem>>, %arg14: memref<16x1xf32, #tpu.memory_space<vmem>>, %arg15: memref<8x1xf32, #tpu.memory_space<vmem>>, %arg16: memref<8x1xf32, #tpu.memory_space<vmem>>, %arg17: memref<16x1xf32, #tpu.memory_space<vmem>>, %arg18: memref<16x1xf32, #tpu.memory_space<vmem>>, %arg19: memref<8x1xf32, #tpu.memory_space<vmem>>, %arg20: memref<8x1xf32, #tpu.memory_space<vmem>>) attributes {dimension_semantics = [#tpu.dimension_semantics<arbitrary>, #tpu.dimension_semantics<arbitrary>], iteration_bounds = array<i64: 3, 1>, scalar_prefetch = 0 : i64, scratch_operands = 8 : i64, tpu.core_type = #tpu.core_type<tc>, window_params = [{transform_indices = @transform_0, window_bounds = array<i64: 2, 1024>}, {pipeline_mode = #tpu.pipeline_mode<synchronous>, transform_indices = @transform_1, window_bounds = array<i64: 16, 24>}, {pipeline_mode = #tpu.pipeline_mode<synchronous>, transform_indices = @transform_2, window_bounds = array<i64: 16, 24>}, {pipeline_mode = #tpu.pipeline_mode<synchronous>, transform_indices = @transform_3, window_bounds = array<i64: 8, 16>}, {pipeline_mode = #tpu.pipeline_mode<synchronous>, transform_indices = @transform_4, window_bounds = array<i64: 16, 1>}, {pipeline_mode = #tpu.pipeline_mode<synchronous>, transform_indices = @transform_5, window_bounds = array<i64: 16, 1>}, {pipeline_mode = #tpu.pipeline_mode<synchronous>, transform_indices = @transform_6, window_bounds = array<i64: 8, 1>}, {pipeline_mode = #tpu.pipeline_mode<synchronous>, transform_indices = @transform_7, window_bounds = array<i64: 8, 1>}, {pipeline_mode = #tpu.pipeline_mode<synchronous>, transform_indices = @transform_8, window_bounds = array<i64: 8, 1>}, {pipeline_mode = #tpu.pipeline_mode<synchronous>, transform_indices = @transform_9, window_bounds = array<i64: 1, 1>}, {transform_indices = @transform_10, window_bounds = array<i64: 1, 1, 1024>}]} {
    %c0_i32 = arith.constant 0 : i32
    %0 = arith.cmpi eq, %arg0, %c0_i32 : i32
    %c0_i32_0 = arith.constant 0 : i32
    %1 = arith.cmpi eq, %arg1, %c0_i32_0 : i32
    %2 = arith.andi %0, %1 : i1
    %3 = arith.extui %2 : i1 to i32
    %c0_i32_1 = arith.constant 0 : i32
    %4 = arith.cmpi ne, %3, %c0_i32_1 : i32
    scf.if %4 {
      %cst_18 = arith.constant 0.000000e+00 : f32
      %50 = vector.broadcast %cst_18 : f32 to vector<16x1xf32>
      %c0_19 = arith.constant 0 : index
      %c0_20 = arith.constant 0 : index
      %51 = vector.load %arg13[%c0_19, %c0_20] : memref<16x1xf32, #tpu.memory_space<vmem>>, vector<16x1xf32>
      tpu.vector_store %arg13[%c0_19, %c0_20], %50 {strides = array<i32>} : memref<16x1xf32, #tpu.memory_space<vmem>>, vector<16x1xf32>,
      %cst_21 = arith.constant 0.000000e+00 : f32
      %52 = vector.broadcast %cst_21 : f32 to vector<16x1xf32>
      %c0_22 = arith.constant 0 : index
      %c0_23 = arith.constant 0 : index
      %53 = vector.load %arg14[%c0_22, %c0_23] : memref<16x1xf32, #tpu.memory_space<vmem>>, vector<16x1xf32>
      tpu.vector_store %arg14[%c0_22, %c0_23], %52 {strides = array<i32>} : memref<16x1xf32, #tpu.memory_space<vmem>>, vector<16x1xf32>,
    } else {
    }
    %c1_i32 = arith.constant 1 : i32
    %5 = arith.cmpi eq, %arg0, %c1_i32 : i32
    %c0_i32_2 = arith.constant 0 : i32
    %6 = arith.cmpi eq, %arg1, %c0_i32_2 : i32
    %7 = arith.andi %5, %6 : i1
    %8 = arith.extui %7 : i1 to i32
    %c0_i32_3 = arith.constant 0 : i32
    %9 = arith.cmpi ne, %8, %c0_i32_3 : i32
    scf.if %9 {
      %c0_18 = arith.constant 0 : index
      %c0_19 = arith.constant 0 : index
      %50 = vector.load %arg13[%c0_18, %c0_19] : memref<16x1xf32, #tpu.memory_space<vmem>>, vector<16x1xf32>
      %cst_20 = arith.constant 1.000000e-03 : f32
      %51 = vector.broadcast %cst_20 : f32 to vector<16x1xf32>
      %52 = arith.mulf %50, %51 : vector<16x1xf32>
      %c0_21 = arith.constant 0 : index
      %c0_22 = arith.constant 0 : index
      %53 = vector.load %arg14[%c0_21, %c0_22] : memref<16x1xf32, #tpu.memory_space<vmem>>, vector<16x1xf32>
      %cst_23 = arith.constant 1.000000e-03 : f32
      %54 = vector.broadcast %cst_23 : f32 to vector<16x1xf32>
      %55 = arith.mulf %53, %54 : vector<16x1xf32>
      %56 = arith.mulf %52, %52 : vector<16x1xf32>
      %57 = arith.subf %55, %56 : vector<16x1xf32>
      %cst_24 = arith.constant 0.000000e+00 : f32
      %58 = vector.broadcast %cst_24 : f32 to vector<16x1xf32>
      %59 = arith.maximumf %57, %58 : vector<16x1xf32>
      %c0_25 = arith.constant 0 : index
      %c0_26 = arith.constant 0 : index
      %60 = vector.load %arg6[%c0_25, %c0_26] : memref<16x1xf32, #tpu.memory_space<vmem>>, vector<16x1xf32>
      %cst_27 = arith.constant 9.99999974E-6 : f32
      %61 = vector.broadcast %cst_27 : f32 to vector<16x1xf32>
      %62 = arith.addf %59, %61 : vector<16x1xf32>
      %63 = math.rsqrt %62 : vector<16x1xf32>
      %64 = arith.mulf %60, %63 : vector<16x1xf32>
      %c0_28 = arith.constant 0 : index
      %c0_29 = arith.constant 0 : index
      %65 = vector.load %arg17[%c0_28, %c0_29] : memref<16x1xf32, #tpu.memory_space<vmem>>, vector<16x1xf32>
      tpu.vector_store %arg17[%c0_28, %c0_29], %64 {strides = array<i32>} : memref<16x1xf32, #tpu.memory_space<vmem>>, vector<16x1xf32>,
      %c0_30 = arith.constant 0 : index
      %c0_31 = arith.constant 0 : index
      %66 = vector.load %arg7[%c0_30, %c0_31] : memref<16x1xf32, #tpu.memory_space<vmem>>, vector<16x1xf32>
      %67 = arith.mulf %52, %64 : vector<16x1xf32>
      %68 = arith.subf %66, %67 : vector<16x1xf32>
      %c0_32 = arith.constant 0 : index
      %c0_33 = arith.constant 0 : index
      %69 = vector.load %arg18[%c0_32, %c0_33] : memref<16x1xf32, #tpu.memory_space<vmem>>, vector<16x1xf32>
      tpu.vector_store %arg18[%c0_32, %c0_33], %68 {strides = array<i32>} : memref<16x1xf32, #tpu.memory_space<vmem>>, vector<16x1xf32>,
      %cst_34 = arith.constant 0.000000e+00 : f32
      %70 = vector.broadcast %cst_34 : f32 to vector<8x1xf32>
      %c0_35 = arith.constant 0 : index
      %c0_36 = arith.constant 0 : index
      %71 = vector.load %arg15[%c0_35, %c0_36] : memref<8x1xf32, #tpu.memory_space<vmem>>, vector<8x1xf32>
      tpu.vector_store %arg15[%c0_35, %c0_36], %70 {strides = array<i32>} : memref<8x1xf32, #tpu.memory_space<vmem>>, vector<8x1xf32>,
      %cst_37 = arith.constant 0.000000e+00 : f32
      %72 = vector.broadcast %cst_37 : f32 to vector<8x1xf32>
      %c0_38 = arith.constant 0 : index
      %c0_39 = arith.constant 0 : index
      %73 = vector.load %arg16[%c0_38, %c0_39] : memref<8x1xf32, #tpu.memory_space<vmem>>, vector<8x1xf32>
      tpu.vector_store %arg16[%c0_38, %c0_39], %72 {strides = array<i32>} : memref<8x1xf32, #tpu.memory_space<vmem>>, vector<8x1xf32>,
    } else {
    }
    %c2_i32 = arith.constant 2 : i32
    %10 = arith.cmpi eq, %arg0, %c2_i32 : i32
    %c0_i32_4 = arith.constant 0 : i32
    %11 = arith.cmpi eq, %arg1, %c0_i32_4 : i32
    %12 = arith.andi %10, %11 : i1
    %13 = arith.extui %12 : i1 to i32
    %c0_i32_5 = arith.constant 0 : i32
    %14 = arith.cmpi ne, %13, %c0_i32_5 : i32
    scf.if %14 {
      %c0_18 = arith.constant 0 : index
      %c0_19 = arith.constant 0 : index
      %50 = vector.load %arg15[%c0_18, %c0_19] : memref<8x1xf32, #tpu.memory_space<vmem>>, vector<8x1xf32>
      %cst_20 = arith.constant 1.000000e-03 : f32
      %51 = vector.broadcast %cst_20 : f32 to vector<8x1xf32>
      %52 = arith.mulf %50, %51 : vector<8x1xf32>
      %c0_21 = arith.constant 0 : index
      %c0_22 = arith.constant 0 : index
      %53 = vector.load %arg16[%c0_21, %c0_22] : memref<8x1xf32, #tpu.memory_space<vmem>>, vector<8x1xf32>
      %cst_23 = arith.constant 1.000000e-03 : f32
      %54 = vector.broadcast %cst_23 : f32 to vector<8x1xf32>
      %55 = arith.mulf %53, %54 : vector<8x1xf32>
      %56 = arith.mulf %52, %52 : vector<8x1xf32>
      %57 = arith.subf %55, %56 : vector<8x1xf32>
      %cst_24 = arith.constant 0.000000e+00 : f32
      %58 = vector.broadcast %cst_24 : f32 to vector<8x1xf32>
      %59 = arith.maximumf %57, %58 : vector<8x1xf32>
      %c0_25 = arith.constant 0 : index
      %c0_26 = arith.constant 0 : index
      %60 = vector.load %arg8[%c0_25, %c0_26] : memref<8x1xf32, #tpu.memory_space<vmem>>, vector<8x1xf32>
      %cst_27 = arith.constant 9.99999974E-6 : f32
      %61 = vector.broadcast %cst_27 : f32 to vector<8x1xf32>
      %62 = arith.addf %59, %61 : vector<8x1xf32>
      %63 = math.rsqrt %62 : vector<8x1xf32>
      %64 = arith.mulf %60, %63 : vector<8x1xf32>
      %c0_28 = arith.constant 0 : index
      %c0_29 = arith.constant 0 : index
      %65 = vector.load %arg19[%c0_28, %c0_29] : memref<8x1xf32, #tpu.memory_space<vmem>>, vector<8x1xf32>
      tpu.vector_store %arg19[%c0_28, %c0_29], %64 {strides = array<i32>} : memref<8x1xf32, #tpu.memory_space<vmem>>, vector<8x1xf32>,
      %c0_30 = arith.constant 0 : index
      %c0_31 = arith.constant 0 : index
      %66 = vector.load %arg9[%c0_30, %c0_31] : memref<8x1xf32, #tpu.memory_space<vmem>>, vector<8x1xf32>
      %67 = arith.mulf %52, %64 : vector<8x1xf32>
      %68 = arith.subf %66, %67 : vector<8x1xf32>
      %c0_32 = arith.constant 0 : index
      %c0_33 = arith.constant 0 : index
      %69 = vector.load %arg20[%c0_32, %c0_33] : memref<8x1xf32, #tpu.memory_space<vmem>>, vector<8x1xf32>
      tpu.vector_store %arg20[%c0_32, %c0_33], %68 {strides = array<i32>} : memref<8x1xf32, #tpu.memory_space<vmem>>, vector<8x1xf32>,
    } else {
    }
    %c0 = arith.constant 0 : index
    %c0_6 = arith.constant 0 : index
    %15 = vector.load %arg2[%c0, %c0_6] : memref<2x1024xi32, #tpu.memory_space<vmem>>, vector<2x1024xi32>
    %16 = vector.extract_strided_slice %15 {offsets = [0, 0], sizes = [1, 1024], strides = [1, 1]} : vector<2x1024xi32> to vector<1x1024xi32>
    %17 = vector.extract_strided_slice %15 {offsets = [1, 0], sizes = [1, 1024], strides = [1, 1]} : vector<2x1024xi32> to vector<1x1024xi32>
    %18 = tpu.iota {dimensions = array<i32: 0>} : vector<24x1024xi32>
    %19 = vector.broadcast %16 : vector<1x1024xi32> to vector<24x1024xi32>
    %20 = arith.cmpi eq, %18, %19 : vector<24x1024xi32>
    %21 = arith.extui %20 : vector<24x1024xi1> to vector<24x1024xi32>
    %22 = arith.sitofp %21 : vector<24x1024xi32> to vector<24x1024xf32>
    %23 = tpu.iota {dimensions = array<i32: 0>} : vector<24x1024xi32>
    %24 = vector.broadcast %17 : vector<1x1024xi32> to vector<24x1024xi32>
    %25 = arith.cmpi eq, %23, %24 : vector<24x1024xi32>
    %26 = arith.extui %25 : vector<24x1024xi1> to vector<24x1024xi32>
    %27 = arith.sitofp %26 : vector<24x1024xi32> to vector<24x1024xf32>
    %c0_7 = arith.constant 0 : index
    %c0_8 = arith.constant 0 : index
    %28 = vector.load %arg3[%c0_7, %c0_8] : memref<16x24xf32, #tpu.memory_space<vmem>>, vector<16x24xf32>
    %cst = arith.constant dense<0.000000e+00> : vector<16x1024xf32>
    %29 = tpu.matmul %28, %22, %cst {dimension_numbers = #tpu.dot_dimension_numbers<[1], [0], [0], [1], [0, 0, 1, 1], [], []>} : vector<16x24xf32>, vector<24x1024xf32>, vector<16x1024xf32> -> vector<16x1024xf32>
    %c0_9 = arith.constant 0 : index
    %c0_10 = arith.constant 0 : index
    %30 = vector.load %arg4[%c0_9, %c0_10] : memref<16x24xf32, #tpu.memory_space<vmem>>, vector<16x24xf32>
    %cst_11 = arith.constant dense<0.000000e+00> : vector<16x1024xf32>
    %31 = tpu.matmul %30, %27, %cst_11 {dimension_numbers = #tpu.dot_dimension_numbers<[1], [0], [0], [1], [0, 0, 1, 1], [], []>} : vector<16x24xf32>, vector<24x1024xf32>, vector<16x1024xf32> -> vector<16x1024xf32>
    %32 = arith.addf %29, %31 : vector<16x1024xf32>
    %c1024_i32 = arith.constant 1024 : i32
    %33 = arith.muli %arg1, %c1024_i32 : i32
    %34 = tpu.iota {dimensions = array<i32: 1>} : vector<1x1024xi32>
    %35 = vector.broadcast %33 : i32 to vector<1x1024xi32>
    %36 = arith.addi %35, %34 : vector<1x1024xi32>
    %c1000_i32 = arith.constant 1000 : i32
    %37 = vector.broadcast %c1000_i32 : i32 to vector<1x1024xi32>
    %38 = arith.cmpi slt, %36, %37 : vector<1x1024xi32>
    %39 = arith.extui %38 : vector<1x1024xi1> to vector<1x1024xi32>
    %40 = arith.sitofp %39 : vector<1x1024xi32> to vector<1x1024xf32>
    %c0_i32_12 = arith.constant 0 : i32
    %41 = arith.cmpi eq, %arg0, %c0_i32_12 : i32
    %42 = arith.extui %41 : i1 to i32
    %c0_i32_13 = arith.constant 0 : i32
    %43 = arith.cmpi ne, %42, %c0_i32_13 : i32
    scf.if %43 {
      %50 = vector.broadcast %40 : vector<1x1024xf32> to vector<16x1024xf32>
      %51 = arith.mulf %32, %50 : vector<16x1024xf32>
      %c0_18 = arith.constant 0 : index
      %c0_19 = arith.constant 0 : index
      %52 = vector.load %arg13[%c0_18, %c0_19] : memref<16x1xf32, #tpu.memory_space<vmem>>, vector<16x1xf32>
      %cst_20 = arith.constant dense<0.000000e+00> : vector<16xf32>
      %53 = vector.multi_reduction <add>, %51, %cst_20 [1] : vector<16x1024xf32> to vector<16xf32>
      %54 = vector.shape_cast %53 : vector<16xf32> to vector<16x1xf32>
      %55 = arith.addf %52, %54 : vector<16x1xf32>
      %c0_21 = arith.constant 0 : index
      %c0_22 = arith.constant 0 : index
      %56 = vector.load %arg13[%c0_21, %c0_22] : memref<16x1xf32, #tpu.memory_space<vmem>>, vector<16x1xf32>
      tpu.vector_store %arg13[%c0_21, %c0_22], %55 {strides = array<i32>} : memref<16x1xf32, #tpu.memory_space<vmem>>, vector<16x1xf32>,
      %c0_23 = arith.constant 0 : index
      %c0_24 = arith.constant 0 : index
      %57 = vector.load %arg14[%c0_23, %c0_24] : memref<16x1xf32, #tpu.memory_space<vmem>>, vector<16x1xf32>
      %58 = arith.mulf %51, %51 : vector<16x1024xf32>
      %cst_25 = arith.constant dense<0.000000e+00> : vector<16xf32>
      %59 = vector.multi_reduction <add>, %58, %cst_25 [1] : vector<16x1024xf32> to vector<16xf32>
      %60 = vector.shape_cast %59 : vector<16xf32> to vector<16x1xf32>
      %61 = arith.addf %57, %60 : vector<16x1xf32>
      %c0_26 = arith.constant 0 : index
      %c0_27 = arith.constant 0 : index
      %62 = vector.load %arg14[%c0_26, %c0_27] : memref<16x1xf32, #tpu.memory_space<vmem>>, vector<16x1xf32>
      tpu.vector_store %arg14[%c0_26, %c0_27], %61 {strides = array<i32>} : memref<16x1xf32, #tpu.memory_space<vmem>>, vector<16x1xf32>,
    } else {
    }
    %c1_i32_14 = arith.constant 1 : i32
    %44 = arith.cmpi eq, %arg0, %c1_i32_14 : i32
    %45 = arith.extui %44 : i1 to i32
    %c0_i32_15 = arith.constant 0 : i32
    %46 = arith.cmpi ne, %45, %c0_i32_15 : i32
    scf.if %46 {
      %c0_18 = arith.constant 0 : index
      %c0_19 = arith.constant 0 : index
      %50 = vector.load %arg17[%c0_18, %c0_19] : memref<16x1xf32, #tpu.memory_space<vmem>>, vector<16x1xf32>
      %51 = vector.broadcast %50 : vector<16x1xf32> to vector<16x1024xf32>
      %52 = arith.mulf %32, %51 : vector<16x1024xf32>
      %c0_20 = arith.constant 0 : index
      %c0_21 = arith.constant 0 : index
      %53 = vector.load %arg18[%c0_20, %c0_21] : memref<16x1xf32, #tpu.memory_space<vmem>>, vector<16x1xf32>
      %54 = vector.broadcast %53 : vector<16x1xf32> to vector<16x1024xf32>
      %55 = arith.addf %52, %54 : vector<16x1024xf32>
      %cst_22 = arith.constant 0.000000e+00 : f32
      %56 = vector.broadcast %cst_22 : f32 to vector<16x1024xf32>
      %57 = arith.maximumf %55, %56 : vector<16x1024xf32>
      %c0_23 = arith.constant 0 : index
      %c0_24 = arith.constant 0 : index
      %58 = vector.load %arg5[%c0_23, %c0_24] : memref<8x16xf32, #tpu.memory_space<vmem>>, vector<8x16xf32>
      %cst_25 = arith.constant dense<0.000000e+00> : vector<8x1024xf32>
      %59 = tpu.matmul %58, %57, %cst_25 {dimension_numbers = #tpu.dot_dimension_numbers<[1], [0], [0], [1], [0, 0, 1, 1], [], []>} : vector<8x16xf32>, vector<16x1024xf32>, vector<8x1024xf32> -> vector<8x1024xf32>
      %60 = vector.broadcast %40 : vector<1x1024xf32> to vector<8x1024xf32>
      %61 = arith.mulf %59, %60 : vector<8x1024xf32>
      %c0_26 = arith.constant 0 : index
      %c0_27 = arith.constant 0 : index
      %62 = vector.load %arg15[%c0_26, %c0_27] : memref<8x1xf32, #tpu.memory_space<vmem>>, vector<8x1xf32>
      %cst_28 = arith.constant dense<0.000000e+00> : vector<8xf32>
      %63 = vector.multi_reduction <add>, %61, %cst_28 [1] : vector<8x1024xf32> to vector<8xf32>
      %64 = vector.shape_cast %63 : vector<8xf32> to vector<8x1xf32>
      %65 = arith.addf %62, %64 : vector<8x1xf32>
      %c0_29 = arith.constant 0 : index
      %c0_30 = arith.constant 0 : index
      %66 = vector.load %arg15[%c0_29, %c0_30] : memref<8x1xf32, #tpu.memory_space<vmem>>, vector<8x1xf32>
      tpu.vector_store %arg15[%c0_29, %c0_30], %65 {strides = array<i32>} : memref<8x1xf32, #tpu.memory_space<vmem>>, vector<8x1xf32>,
      %c0_31 = arith.constant 0 : index
      %c0_32 = arith.constant 0 : index
      %67 = vector.load %arg16[%c0_31, %c0_32] : memref<8x1xf32, #tpu.memory_space<vmem>>, vector<8x1xf32>
      %68 = arith.mulf %61, %61 : vector<8x1024xf32>
      %cst_33 = arith.constant dense<0.000000e+00> : vector<8xf32>
      %69 = vector.multi_reduction <add>, %68, %cst_33 [1] : vector<8x1024xf32> to vector<8xf32>
      %70 = vector.shape_cast %69 : vector<8xf32> to vector<8x1xf32>
      %71 = arith.addf %67, %70 : vector<8x1xf32>
      %c0_34 = arith.constant 0 : index
      %c0_35 = arith.constant 0 : index
      %72 = vector.load %arg16[%c0_34, %c0_35] : memref<8x1xf32, #tpu.memory_space<vmem>>, vector<8x1xf32>
      tpu.vector_store %arg16[%c0_34, %c0_35], %71 {strides = array<i32>} : memref<8x1xf32, #tpu.memory_space<vmem>>, vector<8x1xf32>,
    } else {
    }
    %c2_i32_16 = arith.constant 2 : i32
    %47 = arith.cmpi eq, %arg0, %c2_i32_16 : i32
    %48 = arith.extui %47 : i1 to i32
    %c0_i32_17 = arith.constant 0 : i32
    %49 = arith.cmpi ne, %48, %c0_i32_17 : i32
    scf.if %49 {
      %c0_18 = arith.constant 0 : index
      %c0_19 = arith.constant 0 : index
      %50 = vector.load %arg17[%c0_18, %c0_19] : memref<16x1xf32, #tpu.memory_space<vmem>>, vector<16x1xf32>
      %51 = vector.broadcast %50 : vector<16x1xf32> to vector<16x1024xf32>
      %52 = arith.mulf %32, %51 : vector<16x1024xf32>
      %c0_20 = arith.constant 0 : index
      %c0_21 = arith.constant 0 : index
      %53 = vector.load %arg18[%c0_20, %c0_21] : memref<16x1xf32, #tpu.memory_space<vmem>>, vector<16x1xf32>
      %54 = vector.broadcast %53 : vector<16x1xf32> to vector<16x1024xf32>
      %55 = arith.addf %52, %54 : vector<16x1024xf32>
      %cst_22 = arith.constant 0.000000e+00 : f32
      %56 = vector.broadcast %cst_22 : f32 to vector<16x1024xf32>
      %57 = arith.maximumf %55, %56 : vector<16x1024xf32>
      %c0_23 = arith.constant 0 : index
      %c0_24 = arith.constant 0 : index
      %58 = vector.load %arg5[%c0_23, %c0_24] : memref<8x16xf32, #tpu.memory_space<vmem>>, vector<8x16xf32>
      %cst_25 = arith.constant dense<0.000000e+00> : vector<8x1024xf32>
      %59 = tpu.matmul %58, %57, %cst_25 {dimension_numbers = #tpu.dot_dimension_numbers<[1], [0], [0], [1], [0, 0, 1, 1], [], []>} : vector<8x16xf32>, vector<16x1024xf32>, vector<8x1024xf32> -> vector<8x1024xf32>
      %c0_26 = arith.constant 0 : index
      %c0_27 = arith.constant 0 : index
      %60 = vector.load %arg19[%c0_26, %c0_27] : memref<8x1xf32, #tpu.memory_space<vmem>>, vector<8x1xf32>
      %61 = vector.broadcast %60 : vector<8x1xf32> to vector<8x1024xf32>
      %62 = arith.mulf %59, %61 : vector<8x1024xf32>
      %c0_28 = arith.constant 0 : index
      %c0_29 = arith.constant 0 : index
      %63 = vector.load %arg20[%c0_28, %c0_29] : memref<8x1xf32, #tpu.memory_space<vmem>>, vector<8x1xf32>
      %64 = vector.broadcast %63 : vector<8x1xf32> to vector<8x1024xf32>
      %65 = arith.addf %62, %64 : vector<8x1024xf32>
      %cst_30 = arith.constant 0.000000e+00 : f32
      %66 = vector.broadcast %cst_30 : f32 to vector<8x1024xf32>
      %67 = arith.maximumf %65, %66 : vector<8x1024xf32>
      %c0_31 = arith.constant 0 : index
      %c0_32 = arith.constant 0 : index
      %68 = vector.load %arg10[%c0_31, %c0_32] : memref<8x1xf32, #tpu.memory_space<vmem>>, vector<8x1xf32>
      %69 = vector.broadcast %68 : vector<8x1xf32> to vector<8x1024xf32>
      %70 = arith.mulf %67, %69 : vector<8x1024xf32>
      %cst_33 = arith.constant dense<0.000000e+00> : vector<1024xf32>
      %71 = vector.multi_reduction <add>, %70, %cst_33 [0] : vector<8x1024xf32> to vector<1024xf32>
      %72 = vector.shape_cast %71 : vector<1024xf32> to vector<1x1024xf32>
      %c0_34 = arith.constant 0 : index
      %c0_35 = arith.constant 0 : index
      %73 = vector.load %arg11[%c0_34, %c0_35] : memref<1x1xf32, #tpu.memory_space<vmem>>, vector<1x1xf32>
      %74 = vector.broadcast %73 : vector<1x1xf32> to vector<1x1024xf32>
      %75 = arith.addf %72, %74 : vector<1x1024xf32>
      %76 = arith.negf %75 : vector<1x1024xf32>
      %77 = math.exp %76 : vector<1x1024xf32>
      %cst_36 = arith.constant 1.000000e+00 : f32
      %78 = vector.broadcast %cst_36 : f32 to vector<1x1024xf32>
      %79 = arith.addf %78, %77 : vector<1x1024xf32>
      %80 = arith.divf %78, %79 : vector<1x1024xf32>
      %c0_37 = arith.constant 0 : index
      %c0_38 = arith.constant 0 : index
      %c0_39 = arith.constant 0 : index
      %81 = vector.load %arg12[%c0_37, %c0_38, %c0_39] : memref<1x1x1024xf32, #tpu.memory_space<vmem>>, vector<1x1x1024xf32>
      %82 = vector.shape_cast %81 : vector<1x1x1024xf32> to vector<1x1024xf32>
      %83 = vector.shape_cast %80 : vector<1x1024xf32> to vector<1x1x1024xf32>
      tpu.vector_store %arg12[%c0_37, %c0_38, %c0_39], %83 {strides = array<i32>} : memref<1x1x1024xf32, #tpu.memory_space<vmem>>, vector<1x1x1024xf32>,
    } else {
    }
    return
  }
  func.func @transform_0(%arg0: i32, %arg1: i32) -> (i32, i32) {
    %c0_i32 = arith.constant 0 : i32
    %c0_i32_0 = arith.constant 0 : i32
    return %c0_i32, %arg1 : i32, i32
  }
  func.func @transform_1(%arg0: i32, %arg1: i32) -> (i32, i32) {
    %c0_i32 = arith.constant 0 : i32
    %c0_i32_0 = arith.constant 0 : i32
    %c0_i32_1 = arith.constant 0 : i32
    return %c0_i32, %c0_i32_0 : i32, i32
  }
  func.func @transform_2(%arg0: i32, %arg1: i32) -> (i32, i32) {
    %c0_i32 = arith.constant 0 : i32
    %c0_i32_0 = arith.constant 0 : i32
    %c0_i32_1 = arith.constant 0 : i32
    return %c0_i32, %c0_i32_0 : i32, i32
  }
  func.func @transform_3(%arg0: i32, %arg1: i32) -> (i32, i32) {
    %c0_i32 = arith.constant 0 : i32
    %c0_i32_0 = arith.constant 0 : i32
    %c0_i32_1 = arith.constant 0 : i32
    return %c0_i32, %c0_i32_0 : i32, i32
  }
  func.func @transform_4(%arg0: i32, %arg1: i32) -> (i32, i32) {
    %c0_i32 = arith.constant 0 : i32
    %c0_i32_0 = arith.constant 0 : i32
    %c0_i32_1 = arith.constant 0 : i32
    return %c0_i32, %c0_i32_0 : i32, i32
  }
  func.func @transform_5(%arg0: i32, %arg1: i32) -> (i32, i32) {
    %c0_i32 = arith.constant 0 : i32
    %c0_i32_0 = arith.constant 0 : i32
    %c0_i32_1 = arith.constant 0 : i32
    return %c0_i32, %c0_i32_0 : i32, i32
  }
  func.func @transform_6(%arg0: i32, %arg1: i32) -> (i32, i32) {
    %c0_i32 = arith.constant 0 : i32
    %c0_i32_0 = arith.constant 0 : i32
    %c0_i32_1 = arith.constant 0 : i32
    return %c0_i32, %c0_i32_0 : i32, i32
  }
  func.func @transform_7(%arg0: i32, %arg1: i32) -> (i32, i32) {
    %c0_i32 = arith.constant 0 : i32
    %c0_i32_0 = arith.constant 0 : i32
    %c0_i32_1 = arith.constant 0 : i32
    return %c0_i32, %c0_i32_0 : i32, i32
  }
  func.func @transform_8(%arg0: i32, %arg1: i32) -> (i32, i32) {
    %c0_i32 = arith.constant 0 : i32
    %c0_i32_0 = arith.constant 0 : i32
    %c0_i32_1 = arith.constant 0 : i32
    return %c0_i32, %c0_i32_0 : i32, i32
  }
  func.func @transform_9(%arg0: i32, %arg1: i32) -> (i32, i32) {
    %c0_i32 = arith.constant 0 : i32
    %c0_i32_0 = arith.constant 0 : i32
    %c0_i32_1 = arith.constant 0 : i32
    return %c0_i32, %c0_i32_0 : i32, i32
  }
  func.func @transform_10(%arg0: i32, %arg1: i32) -> (i32, i32, i32) {
    %c0_i32 = arith.constant 0 : i32
    %c0_i32_0 = arith.constant 0 : i32
    %c0_i32_1 = arith.constant 0 : i32
    return %arg1, %c0_i32, %c0_i32_0 : i32, i32, i32
  }
}

</mosaic_0001>

<llo_original>
// kernel: tpu_custom_call.1
$region0: #{tpu_custom_call.1}
  #allocation0 [shape = 'u32[]', space=smem, size = 0x4, offset = 0x4, fixed_abs, tag = 'smem constant byte address 0x4 - core index']
  #allocation1 [shape = 'u32[72,128]{1,0:T(1,128)}', space=vmem, size = 0x9000, scoped, tag = 'internal scratch']
  #allocation2 [shape = 'f32[16,1]{1,0:T(8,128)}', space=vmem, size = 0x2000, scoped, tag = 'scratch operand']
  #allocation3 [shape = 'f32[16,1]{1,0:T(8,128)}', space=vmem, size = 0x2000, scoped, tag = 'scratch operand']
  #allocation4 [shape = 'f32[8,1]{1,0:T(8,128)}', space=vmem, size = 0x1000, scoped, tag = 'scratch operand']
  #allocation5 [shape = 'f32[8,1]{1,0:T(8,128)}', space=vmem, size = 0x1000, scoped, tag = 'scratch operand']
  #allocation6 [shape = 'f32[16,1]{1,0:T(8,128)}', space=vmem, size = 0x2000, scoped, tag = 'scratch operand']
  #allocation7 [shape = 'f32[16,1]{1,0:T(8,128)}', space=vmem, size = 0x2000, scoped, tag = 'scratch operand']
  #allocation8 [shape = 'f32[8,1]{1,0:T(8,128)}', space=vmem, size = 0x1000, scoped, tag = 'scratch operand']
  #allocation9 [shape = 'f32[8,1]{1,0:T(8,128)}', space=vmem, size = 0x1000, scoped, tag = 'scratch operand']
  #allocation10 [shape = 'f32[1,1]{1,0:T(1,128)S(1)}', space=vmem, size = 0x200, scoped, tag = 'scoped memory for tpu_custom_call.1']
  %s0 = inlined_call_operand.vmem [shape: s32[2,1024], index: 0, kind: input, shape index: {}]
  %s1 = inlined_call_operand.vmem [shape: f32[16,24], index: 1, kind: input, shape index: {}]
  %s2 = inlined_call_operand.vmem [shape: f32[16,24], index: 2, kind: input, shape index: {}]
  %s3 = inlined_call_operand.vmem [shape: f32[8,16], index: 3, kind: input, shape index: {}]
  %s4 = inlined_call_operand.vmem [shape: f32[16,1], index: 4, kind: input, shape index: {}]
  %s5 = inlined_call_operand.vmem [shape: f32[16,1], index: 5, kind: input, shape index: {}]
  %s6 = inlined_call_operand.vmem [shape: f32[8,1], index: 6, kind: input, shape index: {}]
  %s7 = inlined_call_operand.vmem [shape: f32[8,1], index: 7, kind: input, shape index: {}]
  %s8 = inlined_call_operand.vmem [shape: f32[8,1], index: 8, kind: input, shape index: {}]
  %s9 = inlined_call_operand.<no memory space> [shape: f32[1,1], index: 9, kind: input, shape index: {}]
  %s10 = inlined_call_operand.hbm [shape: f32[1,1,1024], index: 10, kind: output, shape index: {}]
  %s11 = sld [smem:[#allocation0]]
  $region97: #{tpu_custom_call.1} parent=0
    _
  %s13 = ssub.s32 1, %s11
  %s14 = scalar_select 0, %s13, %s11
  %v15 = vstv %s9
  %16 = vst [vmem:[#allocation10] sm:$0x1] %v15
  $region1: #{tpu_custom_call.1} parent=0
    #allocation11 [shape = 'u8[4096]{0}', space=vmem, size = 0x1000, scoped, tag = 'output window, operand 0, single buffered']
    #allocation12 [shape = 's32[2]{0}', space=sflag, size = 0x8, scoped, tag = 'scoped memory for tpu_custom_call.1']
    %17 = vsyncpa [#allocation12], 0
    loop: start=0, step=1, limit=5
    $region2: #{tpu_custom_call.1} parent=1 // loop_pre_header
      _
    $region3: #{tpu_custom_call.1} parent=1 // loop_header
      %s19 = sphi 0, %s23
      %p20 = scmp.ge.s32.totalorder %s19, 5
      %s26 = sphi 0, %s38
      %s27 = sphi 0, %s34
      %s28 = sphi 0, %s26
      %s29 = sphi 0, %s27
      %s30 = sphi 0, %s28
      %s31 = sphi 0, %s29
      %s41 = sphi 0, %s43
      %s44 = sphi 0, %s41
      %s45 = sphi 0, %s44
      %s61 = sphi 0, %s45
      %s65 = sphi 0, %s65
      %s67 = sphi 0, %s65
      %s68 = sphi 0, %s67
      %s82 = sphi 0, %s68
      %s86 = sphi 0, %s86
      %s88 = sphi 0, %s86
      %s89 = sphi 0, %s88
      %s103 = sphi 0, %s89
      %s107 = sphi 0, %s107
      %s109 = sphi 0, %s107
      %s110 = sphi 0, %s109
      %s124 = sphi 0, %s110
      %s128 = sphi 0, %s128
      %s130 = sphi 0, %s128
      %s131 = sphi 0, %s130
      %s145 = sphi 0, %s131
      %s149 = sphi 0, %s149
      %s151 = sphi 0, %s149
      %s152 = sphi 0, %s151
      %s166 = sphi 0, %s152
      %s170 = sphi 0, %s170
      %s172 = sphi 0, %s170
      %s173 = sphi 0, %s172
      %s187 = sphi 0, %s173
      %s191 = sphi 0, %s191
      %s193 = sphi 0, %s191
      %s194 = sphi 0, %s193
      %s208 = sphi 0, %s194
      %s212 = sphi 0, %s212
      %s214 = sphi 0, %s212
      %s215 = sphi 0, %s214
      %s229 = sphi 0, %s215
      %s233 = sphi 0, %s233
      %s235 = sphi 0, %s233
      %s236 = sphi 0, %s235
      %s250 = sphi 0, %s236
      %s256 = sphi 0, %s258
      %s259 = sphi 0, %s256
      %s260 = sphi 0, %s259
      %s276 = sphi 0, %s260
    $region4: #{tpu_custom_call.1} parent=1 // loop_header_branch
      %22 = sbr.rel (%p20) target = $region8
    $region5: #{tpu_custom_call.1} parent=1 // loop_body
      %s24 = ssub.s32 %s19, 1
      %s25 = ssub.s32 %s19, 2
      %s32 = sadd.s32 1, %s27
      %p33 = scmp.ge.s32.totalorder %s32, 1
      %s34 = scalar_select %p33, 0, %s32
      %s35 = sadd.s32 1, %s26
      %s36 = scalar_select %p33, %s35, %s26
      %p37 = scmp.ge.s32.totalorder %s36, 3
      %s38 = scalar_select %p37, 0, %s36
      %s39 = ssub.s32 %s27, %s34
      %p40 = scmp.eq.s32.totalorder %s39, 0
      %s42 = sadd.s32 %s41, 1
      %s43 = scalar_select %p40, %s41, %s42
      %p46 = pneg %p40
      %p47 = scmp.eq.s32.totalorder %s19, 2
      %p48 = por %p46, %p47
      %p49 = scmp.ne.s32.totalorder %s41, %s44
      %p50 = scmp.eq.s32.totalorder %s19, 0
      %p51 = por %p49, %p50
      %p52 = scmp.ne.s32.totalorder %s41, %s44
      %p53 = scmp.eq.s32.totalorder %s24, 2
      %p54 = por %p52, %p53
      %p55 = scmp.ne.s32.totalorder %s44, %s45
      %p56 = scmp.eq.s32.totalorder %s24, 0
      %p57 = por %p55, %p56
      %p58 = scmp.ne.s32.totalorder %s44, %s45
      %p59 = scmp.eq.s32.totalorder %s25, 2
      %p60 = por %p58, %p59
      %p62 = scmp.ne.s32.totalorder %s45, %s61
      %p63 = scmp.eq.s32.totalorder %s25, 0
      %p64 = por %p62, %p63
      %s66 = sadd.s32 %s65, 1
      %p69 = scmp.eq.s32.totalorder %s19, 2
      %p70 = scmp.ne.s32.totalorder %s65, %s67
      %p71 = scmp.eq.s32.totalorder %s19, 0
      %p72 = por %p70, %p71
      %p73 = scmp.ne.s32.totalorder %s65, %s67
      %p74 = scmp.eq.s32.totalorder %s24, 2
      %p75 = por %p73, %p74
      %p76 = scmp.ne.s32.totalorder %s67, %s68
      %p77 = scmp.eq.s32.totalorder %s24, 0
      %p78 = por %p76, %p77
      %p79 = scmp.ne.s32.totalorder %s67, %s68
      %p80 = scmp.eq.s32.totalorder %s25, 2
      %p81 = por %p79, %p80
      %p83 = scmp.ne.s32.totalorder %s68, %s82
      %p84 = scmp.eq.s32.totalorder %s25, 0
      %p85 = por %p83, %p84
      %s87 = sadd.s32 %s86, 1
      %p90 = scmp.eq.s32.totalorder %s19, 2
      %p91 = scmp.ne.s32.totalorder %s86, %s88
      %p92 = scmp.eq.s32.totalorder %s19, 0
      %p93 = por %p91, %p92
      %p94 = scmp.ne.s32.totalorder %s86, %s88
      %p95 = scmp.eq.s32.totalorder %s24, 2
      %p96 = por %p94, %p95
      %p97 = scmp.ne.s32.totalorder %s88, %s89
      %p98 = scmp.eq.s32.totalorder %s24, 0
      %p99 = por %p97, %p98
      %p100 = scmp.ne.s32.totalorder %s88, %s89
      %p101 = scmp.eq.s32.totalorder %s25, 2
      %p102 = por %p100, %p101
      %p104 = scmp.ne.s32.totalorder %s89, %s103
      %p105 = scmp.eq.s32.totalorder %s25, 0
      %p106 = por %p104, %p105
      %s108 = sadd.s32 %s107, 1
      %p111 = scmp.eq.s32.totalorder %s19, 2
      %p112 = scmp.ne.s32.totalorder %s107, %s109
      %p113 = scmp.eq.s32.totalorder %s19, 0
      %p114 = por %p112, %p113
      %p115 = scmp.ne.s32.totalorder %s107, %s109
      %p116 = scmp.eq.s32.totalorder %s24, 2
      %p117 = por %p115, %p116
      %p118 = scmp.ne.s32.totalorder %s109, %s110
      %p119 = scmp.eq.s32.totalorder %s24, 0
      %p120 = por %p118, %p119
      %p121 = scmp.ne.s32.totalorder %s109, %s110
      %p122 = scmp.eq.s32.totalorder %s25, 2
      %p123 = por %p121, %p122
      %p125 = scmp.ne.s32.totalorder %s110, %s124
      %p126 = scmp.eq.s32.totalorder %s25, 0
      %p127 = por %p125, %p126
      %s129 = sadd.s32 %s128, 1
      %p132 = scmp.eq.s32.totalorder %s19, 2
      %p133 = scmp.ne.s32.totalorder %s128, %s130
      %p134 = scmp.eq.s32.totalorder %s19, 0
      %p135 = por %p133, %p134
      %p136 = scmp.ne.s32.totalorder %s128, %s130
      %p137 = scmp.eq.s32.totalorder %s24, 2
      %p138 = por %p136, %p137
      %p139 = scmp.ne.s32.totalorder %s130, %s131
      %p140 = scmp.eq.s32.totalorder %s24, 0
      %p141 = por %p139, %p140
      %p142 = scmp.ne.s32.totalorder %s130, %s131
      %p143 = scmp.eq.s32.totalorder %s25, 2
      %p144 = por %p142, %p143
      %p146 = scmp.ne.s32.totalorder %s131, %s145
      %p147 = scmp.eq.s32.totalorder %s25, 0
      %p148 = por %p146, %p147
      %s150 = sadd.s32 %s149, 1
      %p153 = scmp.eq.s32.totalorder %s19, 2
      %p154 = scmp.ne.s32.totalorder %s149, %s151
      %p155 = scmp.eq.s32.totalorder %s19, 0
      %p156 = por %p154, %p155
      %p157 = scmp.ne.s32.totalorder %s149, %s151
      %p158 = scmp.eq.s32.totalorder %s24, 2
      %p159 = por %p157, %p158
      %p160 = scmp.ne.s32.totalorder %s151, %s152
      %p161 = scmp.eq.s32.totalorder %s24, 0
      %p162 = por %p160, %p161
      %p163 = scmp.ne.s32.totalorder %s151, %s152
      %p164 = scmp.eq.s32.totalorder %s25, 2
      %p165 = por %p163, %p164
      %p167 = scmp.ne.s32.totalorder %s152, %s166
      %p168 = scmp.eq.s32.totalorder %s25, 0
      %p169 = por %p167, %p168
      %s171 = sadd.s32 %s170, 1
      %p174 = scmp.eq.s32.totalorder %s19, 2
      %p175 = scmp.ne.s32.totalorder %s170, %s172
      %p176 = scmp.eq.s32.totalorder %s19, 0
      %p177 = por %p175, %p176
      %p178 = scmp.ne.s32.totalorder %s170, %s172
      %p179 = scmp.eq.s32.totalorder %s24, 2
      %p180 = por %p178, %p179
      %p181 = scmp.ne.s32.totalorder %s172, %s173
      %p182 = scmp.eq.s32.totalorder %s24, 0
      %p183 = por %p181, %p182
      %p184 = scmp.ne.s32.totalorder %s172, %s173
      %p185 = scmp.eq.s32.totalorder %s25, 2
      %p186 = por %p184, %p185
      %p188 = scmp.ne.s32.totalorder %s173, %s187
      %p189 = scmp.eq.s32.totalorder %s25, 0
      %p190 = por %p188, %p189
      %s192 = sadd.s32 %s191, 1
      %p195 = scmp.eq.s32.totalorder %s19, 2
      %p196 = scmp.ne.s32.totalorder %s191, %s193
      %p197 = scmp.eq.s32.totalorder %s19, 0
      %p198 = por %p196, %p197
      %p199 = scmp.ne.s32.totalorder %s191, %s193
      %p200 = scmp.eq.s32.totalorder %s24, 2
      %p201 = por %p199, %p200
      %p202 = scmp.ne.s32.totalorder %s193, %s194
      %p203 = scmp.eq.s32.totalorder %s24, 0
      %p204 = por %p202, %p203
      %p205 = scmp.ne.s32.totalorder %s193, %s194
      %p206 = scmp.eq.s32.totalorder %s25, 2
      %p207 = por %p205, %p206
      %p209 = scmp.ne.s32.totalorder %s194, %s208
      %p210 = scmp.eq.s32.totalorder %s25, 0
      %p211 = por %p209, %p210
      %s213 = sadd.s32 %s212, 1
      %p216 = scmp.eq.s32.totalorder %s19, 2
      %p217 = scmp.ne.s32.totalorder %s212, %s214
      %p218 = scmp.eq.s32.totalorder %s19, 0
      %p219 = por %p217, %p218
      %p220 = scmp.ne.s32.totalorder %s212, %s214
      %p221 = scmp.eq.s32.totalorder %s24, 2
      %p222 = por %p220, %p221
      %p223 = scmp.ne.s32.totalorder %s214, %s215
      %p224 = scmp.eq.s32.totalorder %s24, 0
      %p225 = por %p223, %p224
      %p226 = scmp.ne.s32.totalorder %s214, %s215
      %p227 = scmp.eq.s32.totalorder %s25, 2
      %p228 = por %p226, %p227
      %p230 = scmp.ne.s32.totalorder %s215, %s229
      %p231 = scmp.eq.s32.totalorder %s25, 0
      %p232 = por %p230, %p231
      %s234 = sadd.s32 %s233, 1
      %p237 = scmp.eq.s32.totalorder %s19, 2
      %p238 = scmp.ne.s32.totalorder %s233, %s235
      %p239 = scmp.eq.s32.totalorder %s19, 0
      %p240 = por %p238, %p239
      %p241 = scmp.ne.s32.totalorder %s233, %s235
      %p242 = scmp.eq.s32.totalorder %s24, 2
      %p243 = por %p241, %p242
      %p244 = scmp.ne.s32.totalorder %s235, %s236
      %p245 = scmp.eq.s32.totalorder %s24, 0
      %p246 = por %p244, %p245
      %p247 = scmp.ne.s32.totalorder %s235, %s236
      %p248 = scmp.eq.s32.totalorder %s25, 2
      %p249 = por %p247, %p248
      %p251 = scmp.ne.s32.totalorder %s236, %s250
      %p252 = scmp.eq.s32.totalorder %s25, 0
      %p253 = por %p251, %p252
      %s254 = ssub.s32 %s27, %s34
      %p255 = scmp.eq.s32.totalorder %s254, 0
      %s257 = sadd.s32 %s256, 1
      %s258 = scalar_select %p255, %s256, %s257
      %p261 = pneg %p255
      %p262 = scmp.eq.s32.totalorder %s19, 2
      %p263 = por %p261, %p262
      %p264 = scmp.ne.s32.totalorder %s256, %s259
      %p265 = scmp.eq.s32.totalorder %s19, 0
      %p266 = por %p264, %p265
      %p267 = scmp.ne.s32.totalorder %s256, %s259
      %p268 = scmp.eq.s32.totalorder %s24, 2
      %p269 = por %p267, %p268
      %p270 = scmp.ne.s32.totalorder %s259, %s260
      %p271 = scmp.eq.s32.totalorder %s24, 0
      %p272 = por %p270, %p271
      %p273 = scmp.ne.s32.totalorder %s259, %s260
      %p274 = scmp.eq.s32.totalorder %s25, 2
      %p275 = por %p273, %p274
      %p277 = scmp.ne.s32.totalorder %s260, %s276
      %p278 = scmp.eq.s32.totalorder %s25, 0
      %p279 = por %p277, %p278
      %p280 = scmp.le.s32.totalorder 1, %s19
      %p281 = scmp.lt.s32.totalorder %s19, 4
      %p282 = pnand %p280, %p281
      %p283 = pneg %p282
      // Predicated region
      $region9: #{tpu_custom_call.1} parent=5 // pred_check
        _
      $region10: #{tpu_custom_call.1} parent=5 // pred_check_branch
        %285 = sbr.rel (%p282) target = $region12
      $region11: #{tpu_custom_call.1} parent=5 // pred_region
        %s286 = ssub.s32 %s19, 1
        // Predicated region
        $region13: #{tpu_custom_call.1} parent=11 // pred_check
          %p287 = pneg %p57
        $region14: #{tpu_custom_call.1} parent=11 // pred_check_branch
          %289 = sbr.rel (%p287) target = $region16
        $region15: #{tpu_custom_call.1} parent=11 // pred_region
          %s290 = smul.u32 8, %s29
          %p291 = scmp.lt.s32.totalorder %s290, 7
          %s292 = scalar_select %p291, %s290, 7
          %s293 = smul.addr %s292, 2
          %s294 = scalar_lea.vmem %s0, %s293
          %s295 = smul.u32 8, %s29
        $region16: #{tpu_custom_call.1} parent=11 // pred_fallthru
          _
        // Predicated region
        $region17: #{tpu_custom_call.1} parent=11 // pred_check
          %p296 = pneg %p78
        $region18: #{tpu_custom_call.1} parent=11 // pred_check_branch
          %298 = sbr.rel (%p296) target = $region20
        $region19: #{tpu_custom_call.1} parent=11 // pred_region
          _
        $region20: #{tpu_custom_call.1} parent=11 // pred_fallthru
          _
        // Predicated region
        $region21: #{tpu_custom_call.1} parent=11 // pred_check
          %p299 = pneg %p99
        $region22: #{tpu_custom_call.1} parent=11 // pred_check_branch
          %301 = sbr.rel (%p299) target = $region24
        $region23: #{tpu_custom_call.1} parent=11 // pred_region
          _
        $region24: #{tpu_custom_call.1} parent=11 // pred_fallthru
          _
        // Predicated region
        $region25: #{tpu_custom_call.1} parent=11 // pred_check
          %p302 = pneg %p120
        $region26: #{tpu_custom_call.1} parent=11 // pred_check_branch
          %304 = sbr.rel (%p302) target = $region28
        $region27: #{tpu_custom_call.1} parent=11 // pred_region
          _
        $region28: #{tpu_custom_call.1} parent=11 // pred_fallthru
          _
        // Predicated region
        $region29: #{tpu_custom_call.1} parent=11 // pred_check
          %p305 = pneg %p141
        $region30: #{tpu_custom_call.1} parent=11 // pred_check_branch
          %307 = sbr.rel (%p305) target = $region32
        $region31: #{tpu_custom_call.1} parent=11 // pred_region
          _
        $region32: #{tpu_custom_call.1} parent=11 // pred_fallthru
          _
        // Predicated region
        $region33: #{tpu_custom_call.1} parent=11 // pred_check
          %p308 = pneg %p162
        $region34: #{tpu_custom_call.1} parent=11 // pred_check_branch
          %310 = sbr.rel (%p308) target = $region36
        $region35: #{tpu_custom_call.1} parent=11 // pred_region
          _
        $region36: #{tpu_custom_call.1} parent=11 // pred_fallthru
          _
        // Predicated region
        $region37: #{tpu_custom_call.1} parent=11 // pred_check
          %p311 = pneg %p183
        $region38: #{tpu_custom_call.1} parent=11 // pred_check_branch
          %313 = sbr.rel (%p311) target = $region40
        $region39: #{tpu_custom_call.1} parent=11 // pred_region
          _
        $region40: #{tpu_custom_call.1} parent=11 // pred_fallthru
          _
        // Predicated region
        $region41: #{tpu_custom_call.1} parent=11 // pred_check
          %p314 = pneg %p204
        $region42: #{tpu_custom_call.1} parent=11 // pred_check_branch
          %316 = sbr.rel (%p314) target = $region44
        $region43: #{tpu_custom_call.1} parent=11 // pred_region
          _
        $region44: #{tpu_custom_call.1} parent=11 // pred_fallthru
          _
        // Predicated region
        $region45: #{tpu_custom_call.1} parent=11 // pred_check
          %p317 = pneg %p225
        $region46: #{tpu_custom_call.1} parent=11 // pred_check_branch
          %319 = sbr.rel (%p317) target = $region48
        $region47: #{tpu_custom_call.1} parent=11 // pred_region
          _
        $region48: #{tpu_custom_call.1} parent=11 // pred_fallthru
          _
        // Predicated region
        $region49: #{tpu_custom_call.1} parent=11 // pred_check
          %p320 = pneg %p246
        $region50: #{tpu_custom_call.1} parent=11 // pred_check_branch
          %322 = sbr.rel (%p320) target = $region52
        $region51: #{tpu_custom_call.1} parent=11 // pred_region
          _
        $region52: #{tpu_custom_call.1} parent=11 // pred_fallthru
          _
      $region12: #{tpu_custom_call.1} parent=5 // pred_fallthru
        _
      %p323 = scmp.lt.s32.totalorder %s19, 3
      // Predicated region
      $region53: #{tpu_custom_call.1} parent=5 // pred_check
        %p324 = pneg %p323
      $region54: #{tpu_custom_call.1} parent=5 // pred_check_branch
        %326 = sbr.rel (%p324) target = $region56
      $region55: #{tpu_custom_call.1} parent=5 // pred_region
        _
      $region56: #{tpu_custom_call.1} parent=5 // pred_fallthru
        _
      %p327 = scmp.le.s32.totalorder 1, %s19
      %p328 = scmp.lt.s32.totalorder %s19, 4
      %p329 = pnand %p327, %p328
      %p330 = pneg %p329
      // Predicated region
      $region57: #{tpu_custom_call.1} parent=5 // pred_check
        _
      $region58: #{tpu_custom_call.1} parent=5 // pred_check_branch
        %332 = sbr.rel (%p329) target = $region60
      $region59: #{tpu_custom_call.1} parent=5 // pred_region
        %s333 = ssub.s32 %s19, 1
        %s334 = smul.u32 8, %s29
        %p335 = scmp.lt.s32.totalorder %s334, 7
        %s336 = scalar_select %p335, %s334, 7
        %s337 = smul.addr %s336, 2
        %s338 = scalar_lea.vmem %s0, %s337
        %p339 = pneg %p57
        %p340 = pneg %p54
        %p341 = pneg %p78
        %p342 = pneg %p75
        %p343 = pneg %p99
        %p344 = pneg %p96
        %p345 = pneg %p120
        %p346 = pneg %p117
        %p347 = pneg %p141
        %p348 = pneg %p138
        %p349 = pneg %p162
        %p350 = pneg %p159
        %p351 = pneg %p183
        %p352 = pneg %p180
        %p353 = pneg %p204
        %p354 = pneg %p201
        %p355 = pneg %p225
        %p356 = pneg %p222
        %p357 = pneg %p246
        %p358 = pneg %p243
        %p359 = pneg %p272
        %p360 = pneg %p269
        %s361 = smul.u32 8, %s29
        %p362 = scmp.lt.s32.totalorder %s361, 7
        %s363 = scalar_select %p362, %s361, 7
        %s364 = smul.addr %s363, 2
        %s365 = scalar_lea.vmem %s0, %s364
        %s366 = smul.u32 8, %s29
        %p367 = scmp.eq.s32.totalorder %s28, 0
        %p368 = scmp.eq.s32.totalorder %s29, 0
        %p369 = pnand %p367, %p368
        %p370 = pneg %p369
        // Predicated region
        $region61: #{tpu_custom_call.1} parent=59 // pred_check
          _
        $region62: #{tpu_custom_call.1} parent=59 // pred_check_branch
          %372 = sbr.rel (%p369) target = $region64
        $region63: #{tpu_custom_call.1} parent=59 // pred_region
          %vm373 = vcmask 7168
          %374 = vst.msk [vmem:[#allocation2] sm:$0xff] %vm373, 0.0
          %375 = vst.msk [vmem:[#allocation2 + $0x8] sm:$0xff] %vm373, 0.0
          %376 = vst.msk [vmem:[#allocation3] sm:$0xff] %vm373, 0.0
          %377 = vst.msk [vmem:[#allocation3 + $0x8] sm:$0xff] %vm373, 0.0
        $region64: #{tpu_custom_call.1} parent=59 // pred_fallthru
          _
        %p378 = scmp.eq.s32.totalorder %s28, 1
        %p379 = pnand %p378, %p368
        %p380 = pneg %p379
        // Predicated region
        $region65: #{tpu_custom_call.1} parent=59 // pred_check
          _
        $region66: #{tpu_custom_call.1} parent=59 // pred_check_branch
          %382 = sbr.rel (%p379) target = $region68
        $region67: #{tpu_custom_call.1} parent=59 // pred_region
          %v383 = vld [vmem:[#allocation2] sm:$0xff]
          %v384 = vld [vmem:[#allocation2 + $0x8] sm:$0xff]
          %v385 = vmul.f32 %v383, 0.001
          %v386 = vmul.f32 %v384, 0.001
          %v387 = vld [vmem:[#allocation3] sm:$0xff]
          %v388 = vld [vmem:[#allocation3 + $0x8] sm:$0xff]
          %v389 = vmul.f32 %v387, 0.001
          %v390 = vmul.f32 %v388, 0.001
          %v391 = vmul.f32 %v385, %v385
          %v392 = vmul.f32 %v386, %v386
          %v393 = vsub.f32 %v389, %v391
          %v394 = vsub.f32 %v390, %v392
          %v395 = vmax.f32 %v393, 0.0
          %v396 = vmax.f32 %v394, 0.0
          %v397 = vld [vmem:[%s4] sm:$0xff]
          %v398 = vld [vmem:[%s4 + $0x8] sm:$0xff]
          %v399 = vadd.f32 %v395, 1e-05
          %v400 = vadd.f32 %v396, 1e-05
          %v401 = vrsqrt.pop %v399
          %v402 = vmul.f32 %v401, %v399
          %v403 = vmul.f32 %v402, %v401
          %v404 = vmul.f32 0.5, %v403
          %v405 = vsub.f32 1.5, %v404
          %v406 = vmul.f32 %v401, %v405
          %vm407 = vweird.f32 %v399
          %vm408 = vweird.f32 %v401
          %vm409 = vmor %vm407, %vm408
          %v410 = vsel %vm409, %v401, %v406
          %v411 = vrsqrt.pop %v400
          %v412 = vmul.f32 %v411, %v400
          %v413 = vmul.f32 %v412, %v411
          %v414 = vmul.f32 0.5, %v413
          %v415 = vsub.f32 1.5, %v414
          %v416 = vmul.f32 %v411, %v415
          %vm417 = vweird.f32 %v400
          %vm418 = vweird.f32 %v411
          %vm419 = vmor %vm417, %vm418
          %v420 = vsel %vm419, %v411, %v416
          %v421 = vmul.f32 %v397, %v410
          %v422 = vmul.f32 %v398, %v420
          %vm423 = vcmask 7168
          %424 = vst.msk [vmem:[#allocation6] sm:$0xff] %vm423, %v421
          %425 = vst.msk [vmem:[#allocation6 + $0x8] sm:$0xff] %vm423, %v422
          %v426 = vld [vmem:[%s5] sm:$0xff]
          %v427 = vld [vmem:[%s5 + $0x8] sm:$0xff]
          %v428 = vmul.f32 %v385, %v421
          %v429 = vmul.f32 %v386, %v422
          %v430 = vsub.f32 %v426, %v428
          %v431 = vsub.f32 %v427, %v429
          %432 = vst.msk [vmem:[#allocation7] sm:$0xff] %vm423, %v430
          %433 = vst.msk [vmem:[#allocation7 + $0x8] sm:$0xff] %vm423, %v431
          %434 = vst.msk [vmem:[#allocation4] sm:$0xff] %vm423, 0.0
          %435 = vst.msk [vmem:[#allocation5] sm:$0xff] %vm423, 0.0
        $region68: #{tpu_custom_call.1} parent=59 // pred_fallthru
          _
        %p436 = scmp.eq.s32.totalorder %s28, 2
        %p437 = pnand %p436, %p368
        %p438 = pneg %p437
        // Predicated region
        $region69: #{tpu_custom_call.1} parent=59 // pred_check
          _
        $region70: #{tpu_custom_call.1} parent=59 // pred_check_branch
          %440 = sbr.rel (%p437) target = $region72
        $region71: #{tpu_custom_call.1} parent=59 // pred_region
          %v441 = vld [vmem:[#allocation4] sm:$0xff]
          %v442 = vmul.f32 %v441, 0.001
          %v443 = vld [vmem:[#allocation5] sm:$0xff]
          %v444 = vmul.f32 %v443, 0.001
          %v445 = vmul.f32 %v442, %v442
          %v446 = vsub.f32 %v444, %v445
          %v447 = vmax.f32 %v446, 0.0
          %v448 = vld [vmem:[%s6] sm:$0xff]
          %v449 = vadd.f32 %v447, 1e-05
          %v450 = vrsqrt.pop %v449
          %v451 = vmul.f32 %v450, %v449
          %v452 = vmul.f32 %v451, %v450
          %v453 = vmul.f32 0.5, %v452
          %v454 = vsub.f32 1.5, %v453
          %v455 = vmul.f32 %v450, %v454
          %vm456 = vweird.f32 %v449
          %vm457 = vweird.f32 %v450
          %vm458 = vmor %vm456, %vm457
          %v459 = vsel %vm458, %v450, %v455
          %v460 = vmul.f32 %v448, %v459
          %vm461 = vcmask 7168
          %462 = vst.msk [vmem:[#allocation8] sm:$0xff] %vm461, %v460
          %v463 = vld [vmem:[%s7] sm:$0xff]
          %v464 = vmul.f32 %v442, %v460
          %v465 = vsub.f32 %v463, %v464
          %466 = vst.msk [vmem:[#allocation9] sm:$0xff] %vm461, %v465
        $region72: #{tpu_custom_call.1} parent=59 // pred_fallthru
          _
        %v467 = vld [vmem:[%s365] sm:$0xff]
        %v468 = vld [vmem:[%s365 + $0x8] sm:$0xff]
        %v469 = vlaneseq
        %v470 = vshrl.u32 %v469, 7
        %v471 = vadd.s32 %v470, 8
        %v472 = vadd.s32 %v470, 16
        %v473 = vperm.slane %v467, 0
        %v474 = vperm.slane %v467, 2
        %v475 = vperm.slane %v467, 4
        %v476 = vperm.slane %v467, 6
        %v477 = vperm.slane %v468, 0
        %v478 = vperm.slane %v468, 2
        %v479 = vperm.slane %v468, 4
        %v480 = vperm.slane %v468, 6
        %v481 = vperm.slane %v473, 0
        %v482 = vperm.slane %v474, 0
        %v483 = vperm.slane %v475, 0
        %v484 = vperm.slane %v476, 0
        %v485 = vperm.slane %v477, 0
        %v486 = vperm.slane %v478, 0
        %v487 = vperm.slane %v479, 0
        %v488 = vperm.slane %v480, 0
        %vm489 = vcmp.eq.s32.totalorder %v470, %v481
        %vm490 = vcmp.eq.s32.totalorder %v470, %v482
        %vm491 = vcmp.eq.s32.totalorder %v470, %v483
        %vm492 = vcmp.eq.s32.totalorder %v470, %v484
        %vm493 = vcmp.eq.s32.totalorder %v470, %v485
        %vm494 = vcmp.eq.s32.totalorder %v470, %v486
        %vm495 = vcmp.eq.s32.totalorder %v470, %v487
        %vm496 = vcmp.eq.s32.totalorder %v470, %v488
        %vm497 = vcmp.eq.s32.totalorder %v471, %v481
        %vm498 = vcmp.eq.s32.totalorder %v471, %v482
        %vm499 = vcmp.eq.s32.totalorder %v471, %v483
        %vm500 = vcmp.eq.s32.totalorder %v471, %v484
        %vm501 = vcmp.eq.s32.totalorder %v471, %v485
        %vm502 = vcmp.eq.s32.totalorder %v471, %v486
        %vm503 = vcmp.eq.s32.totalorder %v471, %v487
        %vm504 = vcmp.eq.s32.totalorder %v471, %v488
        %vm505 = vcmp.eq.s32.totalorder %v472, %v481
        %vm506 = vcmp.eq.s32.totalorder %v472, %v482
        %vm507 = vcmp.eq.s32.totalorder %v472, %v483
        %vm508 = vcmp.eq.s32.totalorder %v472, %v484
        %vm509 = vcmp.eq.s32.totalorder %v472, %v485
        %vm510 = vcmp.eq.s32.totalorder %v472, %v486
        %vm511 = vcmp.eq.s32.totalorder %v472, %v487
        %vm512 = vcmp.eq.s32.totalorder %v472, %v488
        %v513 = vsel %vm489, 1, 0
        %v514 = vsel %vm490, 1, 0
        %v515 = vsel %vm491, 1, 0
        %v516 = vsel %vm492, 1, 0
        %v517 = vsel %vm493, 1, 0
        %v518 = vsel %vm494, 1, 0
        %v519 = vsel %vm495, 1, 0
        %v520 = vsel %vm496, 1, 0
        %v521 = vsel %vm497, 1, 0
        %v522 = vsel %vm498, 1, 0
        %v523 = vsel %vm499, 1, 0
        %v524 = vsel %vm500, 1, 0
        %v525 = vsel %vm501, 1, 0
        %v526 = vsel %vm502, 1, 0
        %v527 = vsel %vm503, 1, 0
        %v528 = vsel %vm504, 1, 0
        %v529 = vsel %vm505, 1, 0
        %v530 = vsel %vm506, 1, 0
        %v531 = vsel %vm507, 1, 0
        %v532 = vsel %vm508, 1, 0
        %v533 = vsel %vm509, 1, 0
        %v534 = vsel %vm510, 1, 0
        %v535 = vsel %vm511, 1, 0
        %v536 = vsel %vm512, 1, 0
        %v537 = vcvt.s32.f32 %v513
        %v538 = vcvt.s32.f32 %v514
        %v539 = vcvt.s32.f32 %v515
        %v540 = vcvt.s32.f32 %v516
        %v541 = vcvt.s32.f32 %v517
        %v542 = vcvt.s32.f32 %v518
        %v543 = vcvt.s32.f32 %v519
        %v544 = vcvt.s32.f32 %v520
        %v545 = vcvt.s32.f32 %v521
        %v546 = vcvt.s32.f32 %v522
        %v547 = vcvt.s32.f32 %v523
        %v548 = vcvt.s32.f32 %v524
        %v549 = vcvt.s32.f32 %v525
        %v550 = vcvt.s32.f32 %v526
        %v551 = vcvt.s32.f32 %v527
        %v552 = vcvt.s32.f32 %v528
        %v553 = vcvt.s32.f32 %v529
        %v554 = vcvt.s32.f32 %v530
        %v555 = vcvt.s32.f32 %v531
        %v556 = vcvt.s32.f32 %v532
        %v557 = vcvt.s32.f32 %v533
        %v558 = vcvt.s32.f32 %v534
        %v559 = vcvt.s32.f32 %v535
        %v560 = vcvt.s32.f32 %v536
        %v561 = vperm.slane %v467, 1
        %v562 = vperm.slane %v467, 3
        %v563 = vperm.slane %v467, 5
        %v564 = vperm.slane %v467, 7
        %v565 = vperm.slane %v468, 1
        %v566 = vperm.slane %v468, 3
        %v567 = vperm.slane %v468, 5
        %v568 = vperm.slane %v468, 7
        %v569 = vperm.slane %v561, 1
        %v570 = vperm.slane %v562, 1
        %v571 = vperm.slane %v563, 1
        %v572 = vperm.slane %v564, 1
        %v573 = vperm.slane %v565, 1
        %v574 = vperm.slane %v566, 1
        %v575 = vperm.slane %v567, 1
        %v576 = vperm.slane %v568, 1
        %vm577 = vcmp.eq.s32.totalorder %v470, %v569
        %vm578 = vcmp.eq.s32.totalorder %v470, %v570
        %vm579 = vcmp.eq.s32.totalorder %v470, %v571
        %vm580 = vcmp.eq.s32.totalorder %v470, %v572
        %vm581 = vcmp.eq.s32.totalorder %v470, %v573
        %vm582 = vcmp.eq.s32.totalorder %v470, %v574
        %vm583 = vcmp.eq.s32.totalorder %v470, %v575
        %vm584 = vcmp.eq.s32.totalorder %v470, %v576
        %vm585 = vcmp.eq.s32.totalorder %v471, %v569
        %vm586 = vcmp.eq.s32.totalorder %v471, %v570
        %vm587 = vcmp.eq.s32.totalorder %v471, %v571
        %vm588 = vcmp.eq.s32.totalorder %v471, %v572
        %vm589 = vcmp.eq.s32.totalorder %v471, %v573
        %vm590 = vcmp.eq.s32.totalorder %v471, %v574
        %vm591 = vcmp.eq.s32.totalorder %v471, %v575
        %vm592 = vcmp.eq.s32.totalorder %v471, %v576
        %vm593 = vcmp.eq.s32.totalorder %v472, %v569
        %vm594 = vcmp.eq.s32.totalorder %v472, %v570
        %vm595 = vcmp.eq.s32.totalorder %v472, %v571
        %vm596 = vcmp.eq.s32.totalorder %v472, %v572
        %vm597 = vcmp.eq.s32.totalorder %v472, %v573
        %vm598 = vcmp.eq.s32.totalorder %v472, %v574
        %vm599 = vcmp.eq.s32.totalorder %v472, %v575
        %vm600 = vcmp.eq.s32.totalorder %v472, %v576
        %v601 = vsel %vm577, 1, 0
        %v602 = vsel %vm578, 1, 0
        %v603 = vsel %vm579, 1, 0
        %v604 = vsel %vm580, 1, 0
        %v605 = vsel %vm581, 1, 0
        %v606 = vsel %vm582, 1, 0
        %v607 = vsel %vm583, 1, 0
        %v608 = vsel %vm584, 1, 0
        %v609 = vsel %vm585, 1, 0
        %v610 = vsel %vm586, 1, 0
        %v611 = vsel %vm587, 1, 0
        %v612 = vsel %vm588, 1, 0
        %v613 = vsel %vm589, 1, 0
        %v614 = vsel %vm590, 1, 0
        %v615 = vsel %vm591, 1, 0
        %v616 = vsel %vm592, 1, 0
        %v617 = vsel %vm593, 1, 0
        %v618 = vsel %vm594, 1, 0
        %v619 = vsel %vm595, 1, 0
        %v620 = vsel %vm596, 1, 0
        %v621 = vsel %vm597, 1, 0
        %v622 = vsel %vm598, 1, 0
        %v623 = vsel %vm599, 1, 0
        %v624 = vsel %vm600, 1, 0
        %v625 = vcvt.s32.f32 %v601
        %v626 = vcvt.s32.f32 %v602
        %v627 = vcvt.s32.f32 %v603
        %v628 = vcvt.s32.f32 %v604
        %v629 = vcvt.s32.f32 %v605
        %v630 = vcvt.s32.f32 %v606
        %v631 = vcvt.s32.f32 %v607
        %v632 = vcvt.s32.f32 %v608
        %v633 = vcvt.s32.f32 %v609
        %v634 = vcvt.s32.f32 %v610
        %v635 = vcvt.s32.f32 %v611
        %v636 = vcvt.s32.f32 %v612
        %v637 = vcvt.s32.f32 %v613
        %v638 = vcvt.s32.f32 %v614
        %v639 = vcvt.s32.f32 %v615
        %v640 = vcvt.s32.f32 %v616
        %v641 = vcvt.s32.f32 %v617
        %v642 = vcvt.s32.f32 %v618
        %v643 = vcvt.s32.f32 %v619
        %v644 = vcvt.s32.f32 %v620
        %v645 = vcvt.s32.f32 %v621
        %v646 = vcvt.s32.f32 %v622
        %v647 = vcvt.s32.f32 %v623
        %v648 = vcvt.s32.f32 %v624
        %v649 = vld [vmem:[%s1] sm:$0xff]
        %v650 = vld [vmem:[%s1 + $0x8] sm:$0xff]
        %v651 = vld [vmem:[%s2] sm:$0xff]
        %v652 = vld [vmem:[%s2 + $0x8] sm:$0xff]
        %vm653 = vcmask 195584
        %v655 = vsel %vm653, %v651, 0
        %v658 = vsel %vm653, %v652, 0
        %660 = vmatpush.msra.mxu0 0.0
        %661 = vmatpush.msra.mxu0 0.0
        %662 = vmatpush.msra.mxu0 0.0
        %663 = vmatpush.msra.mxu0 0.0
        %664 = vmatpush.msra.mxu0 0.0
        %665 = vmatpush.msra.mxu0 0.0
        %666 = vmatpush.msra.mxu0 0.0
        %667 = vmatpush.msra.mxu0 0.0
        %668 = vmatpush.msra.mxu0 0.0
        %669 = vmatpush.msra.mxu0 0.0
        %670 = vmatpush.msra.mxu0 0.0
        %671 = vmatpush.msra.mxu0 0.0
        %672 = vmatpush.msra.mxu0 0.0
        %673 = vmatpush.msra.mxu0 %v641
        %674 = vmatpush.msra.mxu0 %v633
        %675 = vmatpush.msra.mxu0 %v625
        %676 = vmatmul.f32.gmra.mxu0 %v655
        %v677 = vpop.f32.mrf.mxu0
        %v678 = vadd.f32 0.0, %v677
        %679 = vmatmul.f32.gmra.mxu0 %v658
        %v680 = vpop.f32.mrf.mxu0
        %v681 = vadd.f32 0.0, %v680
        %682 = vdwg.mxu0
        %683 = vmatpush.msra.mxu0 0.0
        %684 = vmatpush.msra.mxu0 0.0
        %685 = vmatpush.msra.mxu0 0.0
        %686 = vmatpush.msra.mxu0 0.0
        %687 = vmatpush.msra.mxu0 0.0
        %688 = vmatpush.msra.mxu0 0.0
        %689 = vmatpush.msra.mxu0 0.0
        %690 = vmatpush.msra.mxu0 0.0
        %691 = vmatpush.msra.mxu0 0.0
        %692 = vmatpush.msra.mxu0 0.0
        %693 = vmatpush.msra.mxu0 0.0
        %694 = vmatpush.msra.mxu0 0.0
        %695 = vmatpush.msra.mxu0 0.0
        %696 = vmatpush.msra.mxu0 %v642
        %697 = vmatpush.msra.mxu0 %v634
        %698 = vmatpush.msra.mxu0 %v626
        %699 = vmatmul.f32.gmra.mxu0 %v655
        %v700 = vpop.f32.mrf.mxu0
        %v701 = vadd.f32 0.0, %v700
        %702 = vmatmul.f32.gmra.mxu0 %v658
        %v703 = vpop.f32.mrf.mxu0
        %v704 = vadd.f32 0.0, %v703
        %705 = vdwg.mxu0
        %706 = vmatpush.msra.mxu0 0.0
        %707 = vmatpush.msra.mxu0 0.0
        %708 = vmatpush.msra.mxu0 0.0
        %709 = vmatpush.msra.mxu0 0.0
        %710 = vmatpush.msra.mxu0 0.0
        %711 = vmatpush.msra.mxu0 0.0
        %712 = vmatpush.msra.mxu0 0.0
        %713 = vmatpush.msra.mxu0 0.0
        %714 = vmatpush.msra.mxu0 0.0
        %715 = vmatpush.msra.mxu0 0.0
        %716 = vmatpush.msra.mxu0 0.0
        %717 = vmatpush.msra.mxu0 0.0
        %718 = vmatpush.msra.mxu0 0.0
        %719 = vmatpush.msra.mxu0 %v643
        %720 = vmatpush.msra.mxu0 %v635
        %721 = vmatpush.msra.mxu0 %v627
        %722 = vmatmul.f32.gmra.mxu0 %v655
        %v723 = vpop.f32.mrf.mxu0
        %v724 = vadd.f32 0.0, %v723
        %725 = vmatmul.f32.gmra.mxu0 %v658
        %v726 = vpop.f32.mrf.mxu0
        %v727 = vadd.f32 0.0, %v726
        %728 = vdwg.mxu0
        %729 = vmatpush.msra.mxu0 0.0
        %730 = vmatpush.msra.mxu0 0.0
        %731 = vmatpush.msra.mxu0 0.0
        %732 = vmatpush.msra.mxu0 0.0
        %733 = vmatpush.msra.mxu0 0.0
        %734 = vmatpush.msra.mxu0 0.0
        %735 = vmatpush.msra.mxu0 0.0
        %736 = vmatpush.msra.mxu0 0.0
        %737 = vmatpush.msra.mxu0 0.0
        %738 = vmatpush.msra.mxu0 0.0
        %739 = vmatpush.msra.mxu0 0.0
        %740 = vmatpush.msra.mxu0 0.0
        %741 = vmatpush.msra.mxu0 0.0
        %742 = vmatpush.msra.mxu0 %v644
        %743 = vmatpush.msra.mxu0 %v636
        %744 = vmatpush.msra.mxu0 %v628
        %745 = vmatmul.f32.gmra.mxu0 %v655
        %v746 = vpop.f32.mrf.mxu0
        %v747 = vadd.f32 0.0, %v746
        %748 = vmatmul.f32.gmra.mxu0 %v658
        %v749 = vpop.f32.mrf.mxu0
        %v750 = vadd.f32 0.0, %v749
        %751 = vdwg.mxu0
        %752 = vmatpush.msra.mxu0 0.0
        %753 = vmatpush.msra.mxu0 0.0
        %754 = vmatpush.msra.mxu0 0.0
        %755 = vmatpush.msra.mxu0 0.0
        %756 = vmatpush.msra.mxu0 0.0
        %757 = vmatpush.msra.mxu0 0.0
        %758 = vmatpush.msra.mxu0 0.0
        %759 = vmatpush.msra.mxu0 0.0
        %760 = vmatpush.msra.mxu0 0.0
        %761 = vmatpush.msra.mxu0 0.0
        %762 = vmatpush.msra.mxu0 0.0
        %763 = vmatpush.msra.mxu0 0.0
        %764 = vmatpush.msra.mxu0 0.0
        %765 = vmatpush.msra.mxu0 %v645
        %766 = vmatpush.msra.mxu0 %v637
        %767 = vmatpush.msra.mxu0 %v629
        %768 = vmatmul.f32.gmra.mxu0 %v655
        %v769 = vpop.f32.mrf.mxu0
        %v770 = vadd.f32 0.0, %v769
        %771 = vmatmul.f32.gmra.mxu0 %v658
        %v772 = vpop.f32.mrf.mxu0
        %v773 = vadd.f32 0.0, %v772
        %774 = vdwg.mxu0
        %775 = vmatpush.msra.mxu0 0.0
        %776 = vmatpush.msra.mxu0 0.0
        %777 = vmatpush.msra.mxu0 0.0
        %778 = vmatpush.msra.mxu0 0.0
        %779 = vmatpush.msra.mxu0 0.0
        %780 = vmatpush.msra.mxu0 0.0
        %781 = vmatpush.msra.mxu0 0.0
        %782 = vmatpush.msra.mxu0 0.0
        %783 = vmatpush.msra.mxu0 0.0
        %784 = vmatpush.msra.mxu0 0.0
        %785 = vmatpush.msra.mxu0 0.0
        %786 = vmatpush.msra.mxu0 0.0
        %787 = vmatpush.msra.mxu0 0.0
        %788 = vmatpush.msra.mxu0 %v646
        %789 = vmatpush.msra.mxu0 %v638
        %790 = vmatpush.msra.mxu0 %v630
        %791 = vmatmul.f32.gmra.mxu0 %v655
        %v792 = vpop.f32.mrf.mxu0
        %v793 = vadd.f32 0.0, %v792
        %794 = vmatmul.f32.gmra.mxu0 %v658
        %v795 = vpop.f32.mrf.mxu0
        %v796 = vadd.f32 0.0, %v795
        %797 = vdwg.mxu0
        %798 = vmatpush.msra.mxu0 0.0
        %799 = vmatpush.msra.mxu0 0.0
        %800 = vmatpush.msra.mxu0 0.0
        %801 = vmatpush.msra.mxu0 0.0
        %802 = vmatpush.msra.mxu0 0.0
        %803 = vmatpush.msra.mxu0 0.0
        %804 = vmatpush.msra.mxu0 0.0
        %805 = vmatpush.msra.mxu0 0.0
        %806 = vmatpush.msra.mxu0 0.0
        %807 = vmatpush.msra.mxu0 0.0
        %808 = vmatpush.msra.mxu0 0.0
        %809 = vmatpush.msra.mxu0 0.0
        %810 = vmatpush.msra.mxu0 0.0
        %811 = vmatpush.msra.mxu0 %v647
        %812 = vmatpush.msra.mxu0 %v639
        %813 = vmatpush.msra.mxu0 %v631
        %814 = vmatmul.f32.gmra.mxu0 %v655
        %v815 = vpop.f32.mrf.mxu0
        %v816 = vadd.f32 0.0, %v815
        %817 = vmatmul.f32.gmra.mxu0 %v658
        %v818 = vpop.f32.mrf.mxu0
        %v819 = vadd.f32 0.0, %v818
        %820 = vdwg.mxu0
        %821 = vmatpush.msra.mxu0 0.0
        %822 = vmatpush.msra.mxu0 0.0
        %823 = vmatpush.msra.mxu0 0.0
        %824 = vmatpush.msra.mxu0 0.0
        %825 = vmatpush.msra.mxu0 0.0
        %826 = vmatpush.msra.mxu0 0.0
        %827 = vmatpush.msra.mxu0 0.0
        %828 = vmatpush.msra.mxu0 0.0
        %829 = vmatpush.msra.mxu0 0.0
        %830 = vmatpush.msra.mxu0 0.0
        %831 = vmatpush.msra.mxu0 0.0
        %832 = vmatpush.msra.mxu0 0.0
        %833 = vmatpush.msra.mxu0 0.0
        %834 = vmatpush.msra.mxu0 %v648
        %835 = vmatpush.msra.mxu0 %v640
        %836 = vmatpush.msra.mxu0 %v632
        %837 = vmatmul.f32.gmra.mxu0 %v655
        %v838 = vpop.f32.mrf.mxu0
        %v839 = vadd.f32 0.0, %v838
        %840 = vmatmul.f32.gmra.mxu0 %v658
        %v841 = vpop.f32.mrf.mxu0
        %v842 = vadd.f32 0.0, %v841
        %843 = vdwg.mxu0
        %v845 = vsel %vm653, %v649, 0
        %v848 = vsel %vm653, %v650, 0
        %850 = vmatpush.msra.mxu0 0.0
        %851 = vmatpush.msra.mxu0 0.0
        %852 = vmatpush.msra.mxu0 0.0
        %853 = vmatpush.msra.mxu0 0.0
        %854 = vmatpush.msra.mxu0 0.0
        %855 = vmatpush.msra.mxu0 0.0
        %856 = vmatpush.msra.mxu0 0.0
        %857 = vmatpush.msra.mxu0 0.0
        %858 = vmatpush.msra.mxu0 0.0
        %859 = vmatpush.msra.mxu0 0.0
        %860 = vmatpush.msra.mxu0 0.0
        %861 = vmatpush.msra.mxu0 0.0
        %862 = vmatpush.msra.mxu0 0.0
        %863 = vmatpush.msra.mxu0 %v553
        %864 = vmatpush.msra.mxu0 %v545
        %865 = vmatpush.msra.mxu0 %v537
        %866 = vmatmul.f32.gmra.mxu0 %v845
        %v867 = vpop.f32.mrf.mxu0
        %v868 = vadd.f32 %v678, %v867
        %869 = vmatmul.f32.gmra.mxu0 %v848
        %v870 = vpop.f32.mrf.mxu0
        %v871 = vadd.f32 %v681, %v870
        %872 = vdwg.mxu0
        %873 = vmatpush.msra.mxu0 0.0
        %874 = vmatpush.msra.mxu0 0.0
        %875 = vmatpush.msra.mxu0 0.0
        %876 = vmatpush.msra.mxu0 0.0
        %877 = vmatpush.msra.mxu0 0.0
        %878 = vmatpush.msra.mxu0 0.0
        %879 = vmatpush.msra.mxu0 0.0
        %880 = vmatpush.msra.mxu0 0.0
        %881 = vmatpush.msra.mxu0 0.0
        %882 = vmatpush.msra.mxu0 0.0
        %883 = vmatpush.msra.mxu0 0.0
        %884 = vmatpush.msra.mxu0 0.0
        %885 = vmatpush.msra.mxu0 0.0
        %886 = vmatpush.msra.mxu0 %v554
        %887 = vmatpush.msra.mxu0 %v546
        %888 = vmatpush.msra.mxu0 %v538
        %889 = vmatmul.f32.gmra.mxu0 %v845
        %v890 = vpop.f32.mrf.mxu0
        %v891 = vadd.f32 %v701, %v890
        %892 = vmatmul.f32.gmra.mxu0 %v848
        %v893 = vpop.f32.mrf.mxu0
        %v894 = vadd.f32 %v704, %v893
        %895 = vdwg.mxu0
        %896 = vmatpush.msra.mxu0 0.0
        %897 = vmatpush.msra.mxu0 0.0
        %898 = vmatpush.msra.mxu0 0.0
        %899 = vmatpush.msra.mxu0 0.0
        %900 = vmatpush.msra.mxu0 0.0
        %901 = vmatpush.msra.mxu0 0.0
        %902 = vmatpush.msra.mxu0 0.0
        %903 = vmatpush.msra.mxu0 0.0
        %904 = vmatpush.msra.mxu0 0.0
        %905 = vmatpush.msra.mxu0 0.0
        %906 = vmatpush.msra.mxu0 0.0
        %907 = vmatpush.msra.mxu0 0.0
        %908 = vmatpush.msra.mxu0 0.0
        %909 = vmatpush.msra.mxu0 %v555
        %910 = vmatpush.msra.mxu0 %v547
        %911 = vmatpush.msra.mxu0 %v539
        %912 = vmatmul.f32.gmra.mxu0 %v845
        %v913 = vpop.f32.mrf.mxu0
        %v914 = vadd.f32 %v724, %v913
        %915 = vmatmul.f32.gmra.mxu0 %v848
        %v916 = vpop.f32.mrf.mxu0
        %v917 = vadd.f32 %v727, %v916
        %918 = vdwg.mxu0
        %919 = vmatpush.msra.mxu0 0.0
        %920 = vmatpush.msra.mxu0 0.0
        %921 = vmatpush.msra.mxu0 0.0
        %922 = vmatpush.msra.mxu0 0.0
        %923 = vmatpush.msra.mxu0 0.0
        %924 = vmatpush.msra.mxu0 0.0
        %925 = vmatpush.msra.mxu0 0.0
        %926 = vmatpush.msra.mxu0 0.0
        %927 = vmatpush.msra.mxu0 0.0
        %928 = vmatpush.msra.mxu0 0.0
        %929 = vmatpush.msra.mxu0 0.0
        %930 = vmatpush.msra.mxu0 0.0
        %931 = vmatpush.msra.mxu0 0.0
        %932 = vmatpush.msra.mxu0 %v556
        %933 = vmatpush.msra.mxu0 %v548
        %934 = vmatpush.msra.mxu0 %v540
        %935 = vmatmul.f32.gmra.mxu0 %v845
        %v936 = vpop.f32.mrf.mxu0
        %v937 = vadd.f32 %v747, %v936
        %938 = vmatmul.f32.gmra.mxu0 %v848
        %v939 = vpop.f32.mrf.mxu0
        %v940 = vadd.f32 %v750, %v939
        %941 = vdwg.mxu0
        %942 = vmatpush.msra.mxu0 0.0
        %943 = vmatpush.msra.mxu0 0.0
        %944 = vmatpush.msra.mxu0 0.0
        %945 = vmatpush.msra.mxu0 0.0
        %946 = vmatpush.msra.mxu0 0.0
        %947 = vmatpush.msra.mxu0 0.0
        %948 = vmatpush.msra.mxu0 0.0
        %949 = vmatpush.msra.mxu0 0.0
        %950 = vmatpush.msra.mxu0 0.0
        %951 = vmatpush.msra.mxu0 0.0
        %952 = vmatpush.msra.mxu0 0.0
        %953 = vmatpush.msra.mxu0 0.0
        %954 = vmatpush.msra.mxu0 0.0
        %955 = vmatpush.msra.mxu0 %v557
        %956 = vmatpush.msra.mxu0 %v549
        %957 = vmatpush.msra.mxu0 %v541
        %958 = vmatmul.f32.gmra.mxu0 %v845
        %v959 = vpop.f32.mrf.mxu0
        %v960 = vadd.f32 %v770, %v959
        %961 = vmatmul.f32.gmra.mxu0 %v848
        %v962 = vpop.f32.mrf.mxu0
        %v963 = vadd.f32 %v773, %v962
        %964 = vdwg.mxu0
        %965 = vmatpush.msra.mxu0 0.0
        %966 = vmatpush.msra.mxu0 0.0
        %967 = vmatpush.msra.mxu0 0.0
        %968 = vmatpush.msra.mxu0 0.0
        %969 = vmatpush.msra.mxu0 0.0
        %970 = vmatpush.msra.mxu0 0.0
        %971 = vmatpush.msra.mxu0 0.0
        %972 = vmatpush.msra.mxu0 0.0
        %973 = vmatpush.msra.mxu0 0.0
        %974 = vmatpush.msra.mxu0 0.0
        %975 = vmatpush.msra.mxu0 0.0
        %976 = vmatpush.msra.mxu0 0.0
        %977 = vmatpush.msra.mxu0 0.0
        %978 = vmatpush.msra.mxu0 %v558
        %979 = vmatpush.msra.mxu0 %v550
        %980 = vmatpush.msra.mxu0 %v542
        %981 = vmatmul.f32.gmra.mxu0 %v845
        %v982 = vpop.f32.mrf.mxu0
        %v983 = vadd.f32 %v793, %v982
        %984 = vmatmul.f32.gmra.mxu0 %v848
        %v985 = vpop.f32.mrf.mxu0
        %v986 = vadd.f32 %v796, %v985
        %987 = vdwg.mxu0
        %988 = vmatpush.msra.mxu0 0.0
        %989 = vmatpush.msra.mxu0 0.0
        %990 = vmatpush.msra.mxu0 0.0
        %991 = vmatpush.msra.mxu0 0.0
        %992 = vmatpush.msra.mxu0 0.0
        %993 = vmatpush.msra.mxu0 0.0
        %994 = vmatpush.msra.mxu0 0.0
        %995 = vmatpush.msra.mxu0 0.0
        %996 = vmatpush.msra.mxu0 0.0
        %997 = vmatpush.msra.mxu0 0.0
        %998 = vmatpush.msra.mxu0 0.0
        %999 = vmatpush.msra.mxu0 0.0
        %1000 = vmatpush.msra.mxu0 0.0
        %1001 = vmatpush.msra.mxu0 %v559
        %1002 = vmatpush.msra.mxu0 %v551
        %1003 = vmatpush.msra.mxu0 %v543
        %1004 = vmatmul.f32.gmra.mxu0 %v845
        %v1005 = vpop.f32.mrf.mxu0
        %v1006 = vadd.f32 %v816, %v1005
        %1007 = vmatmul.f32.gmra.mxu0 %v848
        %v1008 = vpop.f32.mrf.mxu0
        %v1009 = vadd.f32 %v819, %v1008
        %1010 = vdwg.mxu0
        %1011 = vmatpush.msra.mxu0 0.0
        %1012 = vmatpush.msra.mxu0 0.0
        %1013 = vmatpush.msra.mxu0 0.0
        %1014 = vmatpush.msra.mxu0 0.0
        %1015 = vmatpush.msra.mxu0 0.0
        %1016 = vmatpush.msra.mxu0 0.0
        %1017 = vmatpush.msra.mxu0 0.0
        %1018 = vmatpush.msra.mxu0 0.0
        %1019 = vmatpush.msra.mxu0 0.0
        %1020 = vmatpush.msra.mxu0 0.0
        %1021 = vmatpush.msra.mxu0 0.0
        %1022 = vmatpush.msra.mxu0 0.0
        %1023 = vmatpush.msra.mxu0 0.0
        %1024 = vmatpush.msra.mxu0 %v560
        %1025 = vmatpush.msra.mxu0 %v552
        %1026 = vmatpush.msra.mxu0 %v544
        %1027 = vmatmul.f32.gmra.mxu0 %v845
        %v1028 = vpop.f32.mrf.mxu0
        %v1029 = vadd.f32 %v839, %v1028
        %1030 = vmatmul.f32.gmra.mxu0 %v848
        %v1031 = vpop.f32.mrf.mxu0
        %v1032 = vadd.f32 %v842, %v1031
        %1033 = vdwg.mxu0
        %s1034 = smul.u32 %s29, 1024
        %v1035 = vlaneseq
        %v1036 = vand.u32 %v1035, 127
        %v1037 = vadd.s32 %v1036, 128
        %v1038 = vadd.s32 %v1036, 256
        %v1039 = vadd.s32 %v1036, 384
        %v1040 = vadd.s32 %v1036, 512
        %v1041 = vadd.s32 %v1036, 640
        %v1042 = vadd.s32 %v1036, 768
        %v1043 = vadd.s32 %v1036, 896
        %v1044 = vstv %s1034
        %v1045 = vadd.s32 %v1044, %v1036
        %v1046 = vadd.s32 %v1044, %v1037
        %v1047 = vadd.s32 %v1044, %v1038
        %v1048 = vadd.s32 %v1044, %v1039
        %v1049 = vadd.s32 %v1044, %v1040
        %v1050 = vadd.s32 %v1044, %v1041
        %v1051 = vadd.s32 %v1044, %v1042
        %v1052 = vadd.s32 %v1044, %v1043
        %vm1053 = vcmp.lt.s32.totalorder %v1045, 1000
        %vm1054 = vcmp.lt.s32.totalorder %v1046, 1000
        %vm1055 = vcmp.lt.s32.totalorder %v1047, 1000
        %vm1056 = vcmp.lt.s32.totalorder %v1048, 1000
        %vm1057 = vcmp.lt.s32.totalorder %v1049, 1000
        %vm1058 = vcmp.lt.s32.totalorder %v1050, 1000
        %vm1059 = vcmp.lt.s32.totalorder %v1051, 1000
        %vm1060 = vcmp.lt.s32.totalorder %v1052, 1000
        %v1061 = vsel %vm1053, 1, 0
        %v1062 = vsel %vm1054, 1, 0
        %v1063 = vsel %vm1055, 1, 0
        %v1064 = vsel %vm1056, 1, 0
        %v1065 = vsel %vm1057, 1, 0
        %v1066 = vsel %vm1058, 1, 0
        %v1067 = vsel %vm1059, 1, 0
        %v1068 = vsel %vm1060, 1, 0
        %v1069 = vcvt.s32.f32 %v1061
        %v1070 = vcvt.s32.f32 %v1062
        %v1071 = vcvt.s32.f32 %v1063
        %v1072 = vcvt.s32.f32 %v1064
        %v1073 = vcvt.s32.f32 %v1065
        %v1074 = vcvt.s32.f32 %v1066
        %v1075 = vcvt.s32.f32 %v1067
        %v1076 = vcvt.s32.f32 %v1068
        // Predicated region
        $region73: #{tpu_custom_call.1} parent=59 // pred_check
          %p1077 = pneg %p367
        $region74: #{tpu_custom_call.1} parent=59 // pred_check_branch
          %1079 = sbr.rel (%p1077) target = $region76
        $region75: #{tpu_custom_call.1} parent=59 // pred_region
          %v1080 = vmul.f32 %v868, %v1069
          %v1081 = vmul.f32 %v891, %v1070
          %v1082 = vmul.f32 %v914, %v1071
          %v1083 = vmul.f32 %v937, %v1072
          %v1084 = vmul.f32 %v960, %v1073
          %v1085 = vmul.f32 %v983, %v1074
          %v1086 = vmul.f32 %v1006, %v1075
          %v1087 = vmul.f32 %v1029, %v1076
          %v1088 = vmul.f32 %v871, %v1069
          %v1089 = vmul.f32 %v894, %v1070
          %v1090 = vmul.f32 %v917, %v1071
          %v1091 = vmul.f32 %v940, %v1072
          %v1092 = vmul.f32 %v963, %v1073
          %v1093 = vmul.f32 %v986, %v1074
          %v1094 = vmul.f32 %v1009, %v1075
          %v1095 = vmul.f32 %v1032, %v1076
          %v1096 = vld [vmem:[#allocation2] sm:$0xff]
          %v1097 = vld [vmem:[#allocation2 + $0x8] sm:$0xff]
          %v1098 = vadd.f32 %v1080, %v1081
          %v1099 = vadd.f32 %v1098, %v1082
          %v1100 = vadd.f32 %v1099, %v1083
          %v1101 = vadd.f32 %v1100, %v1084
          %v1102 = vadd.f32 %v1101, %v1085
          %v1103 = vadd.f32 %v1102, %v1086
          %v1104 = vadd.f32 %v1103, %v1087
          %1105 = vadd.xlane.f32.xlu0 %v1104
          %v1106 = vpop.xlane.xlu0 %1105
          %v1107 = vadd.f32 %v1088, %v1089
          %v1108 = vadd.f32 %v1107, %v1090
          %v1109 = vadd.f32 %v1108, %v1091
          %v1110 = vadd.f32 %v1109, %v1092
          %v1111 = vadd.f32 %v1110, %v1093
          %v1112 = vadd.f32 %v1111, %v1094
          %v1113 = vadd.f32 %v1112, %v1095
          %1114 = vadd.xlane.f32.xlu0 %v1113
          %v1115 = vpop.xlane.xlu0 %1114
          %v1116 = vadd.f32 %v1096, %v1106
          %v1117 = vadd.f32 %v1097, %v1115
          %vm1118 = vcmask 7168
          %1119 = vst.msk [vmem:[#allocation2] sm:$0xff] %vm1118, %v1116
          %1120 = vst.msk [vmem:[#allocation2 + $0x8] sm:$0xff] %vm1118, %v1117
          %v1121 = vld [vmem:[#allocation3] sm:$0xff]
          %v1122 = vld [vmem:[#allocation3 + $0x8] sm:$0xff]
          %v1123 = vmul.f32 %v1080, %v1080
          %v1124 = vmul.f32 %v1081, %v1081
          %v1125 = vmul.f32 %v1082, %v1082
          %v1126 = vmul.f32 %v1083, %v1083
          %v1127 = vmul.f32 %v1084, %v1084
          %v1128 = vmul.f32 %v1085, %v1085
          %v1129 = vmul.f32 %v1086, %v1086
          %v1130 = vmul.f32 %v1087, %v1087
          %v1131 = vmul.f32 %v1088, %v1088
          %v1132 = vmul.f32 %v1089, %v1089
          %v1133 = vmul.f32 %v1090, %v1090
          %v1134 = vmul.f32 %v1091, %v1091
          %v1135 = vmul.f32 %v1092, %v1092
          %v1136 = vmul.f32 %v1093, %v1093
          %v1137 = vmul.f32 %v1094, %v1094
          %v1138 = vmul.f32 %v1095, %v1095
          %v1139 = vadd.f32 %v1123, %v1124
          %v1140 = vadd.f32 %v1139, %v1125
          %v1141 = vadd.f32 %v1140, %v1126
          %v1142 = vadd.f32 %v1141, %v1127
          %v1143 = vadd.f32 %v1142, %v1128
          %v1144 = vadd.f32 %v1143, %v1129
          %v1145 = vadd.f32 %v1144, %v1130
          %1146 = vadd.xlane.f32.xlu0 %v1145
          %v1147 = vpop.xlane.xlu0 %1146
          %v1148 = vadd.f32 %v1131, %v1132
          %v1149 = vadd.f32 %v1148, %v1133
          %v1150 = vadd.f32 %v1149, %v1134
          %v1151 = vadd.f32 %v1150, %v1135
          %v1152 = vadd.f32 %v1151, %v1136
          %v1153 = vadd.f32 %v1152, %v1137
          %v1154 = vadd.f32 %v1153, %v1138
          %1155 = vadd.xlane.f32.xlu0 %v1154
          %v1156 = vpop.xlane.xlu0 %1155
          %v1157 = vadd.f32 %v1121, %v1147
          %v1158 = vadd.f32 %v1122, %v1156
          %1159 = vst.msk [vmem:[#allocation3] sm:$0xff] %vm1118, %v1157
          %1160 = vst.msk [vmem:[#allocation3 + $0x8] sm:$0xff] %vm1118, %v1158
        $region76: #{tpu_custom_call.1} parent=59 // pred_fallthru
          _
        // Predicated region
        $region77: #{tpu_custom_call.1} parent=59 // pred_check
          %p1161 = pneg %p378
        $region78: #{tpu_custom_call.1} parent=59 // pred_check_branch
          %1163 = sbr.rel (%p1161) target = $region80
        $region79: #{tpu_custom_call.1} parent=59 // pred_region
          %v1164 = vld [vmem:[#allocation6] sm:$0xff]
          %v1165 = vld [vmem:[#allocation6 + $0x8] sm:$0xff]
          %1167 = vset.pattern.permute.xlu0 0
          %1168 = vperm.xlu0 %1167, %v1164
          %v1169 = vpop.permute.xlu0 %1168
          %1172 = vset.pattern.permute.xlu0 0
          %1173 = vperm.xlu0 %1172, %v1165
          %v1174 = vpop.permute.xlu0 %1173
          %v1176 = vmul.f32 %v868, %v1169
          %v1177 = vmul.f32 %v891, %v1169
          %v1178 = vmul.f32 %v914, %v1169
          %v1179 = vmul.f32 %v937, %v1169
          %v1180 = vmul.f32 %v960, %v1169
          %v1181 = vmul.f32 %v983, %v1169
          %v1182 = vmul.f32 %v1006, %v1169
          %v1183 = vmul.f32 %v1029, %v1169
          %v1184 = vmul.f32 %v871, %v1174
          %v1185 = vmul.f32 %v894, %v1174
          %v1186 = vmul.f32 %v917, %v1174
          %v1187 = vmul.f32 %v940, %v1174
          %v1188 = vmul.f32 %v963, %v1174
          %v1189 = vmul.f32 %v986, %v1174
          %v1190 = vmul.f32 %v1009, %v1174
          %v1191 = vmul.f32 %v1032, %v1174
          %v1192 = vld [vmem:[#allocation7] sm:$0xff]
          %v1193 = vld [vmem:[#allocation7 + $0x8] sm:$0xff]
          %1195 = vset.pattern.permute.xlu0 0
          %1196 = vperm.xlu0 %1195, %v1192
          %v1197 = vpop.permute.xlu0 %1196
          %1200 = vset.pattern.permute.xlu0 0
          %1201 = vperm.xlu0 %1200, %v1193
          %v1202 = vpop.permute.xlu0 %1201
          %v1204 = vadd.f32 %v1176, %v1197
          %v1205 = vadd.f32 %v1177, %v1197
          %v1206 = vadd.f32 %v1178, %v1197
          %v1207 = vadd.f32 %v1179, %v1197
          %v1208 = vadd.f32 %v1180, %v1197
          %v1209 = vadd.f32 %v1181, %v1197
          %v1210 = vadd.f32 %v1182, %v1197
          %v1211 = vadd.f32 %v1183, %v1197
          %v1212 = vadd.f32 %v1184, %v1202
          %v1213 = vadd.f32 %v1185, %v1202
          %v1214 = vadd.f32 %v1186, %v1202
          %v1215 = vadd.f32 %v1187, %v1202
          %v1216 = vadd.f32 %v1188, %v1202
          %v1217 = vadd.f32 %v1189, %v1202
          %v1218 = vadd.f32 %v1190, %v1202
          %v1219 = vadd.f32 %v1191, %v1202
          %v1220 = vmax.f32 %v1204, 0.0
          %v1221 = vmax.f32 %v1205, 0.0
          %v1222 = vmax.f32 %v1206, 0.0
          %v1223 = vmax.f32 %v1207, 0.0
          %v1224 = vmax.f32 %v1208, 0.0
          %v1225 = vmax.f32 %v1209, 0.0
          %v1226 = vmax.f32 %v1210, 0.0
          %v1227 = vmax.f32 %v1211, 0.0
          %v1228 = vmax.f32 %v1212, 0.0
          %v1229 = vmax.f32 %v1213, 0.0
          %v1230 = vmax.f32 %v1214, 0.0
          %v1231 = vmax.f32 %v1215, 0.0
          %v1232 = vmax.f32 %v1216, 0.0
          %v1233 = vmax.f32 %v1217, 0.0
          %v1234 = vmax.f32 %v1218, 0.0
          %v1235 = vmax.f32 %v1219, 0.0
          %v1236 = vld [vmem:[%s3] sm:$0xff]
          %vm1237 = vcmask 130048
          %v1239 = vsel %vm1237, %v1236, 0
          %1241 = vmatpush.msra.mxu0 0.0
          %1242 = vmatpush.msra.mxu0 0.0
          %1243 = vmatpush.msra.mxu0 0.0
          %1244 = vmatpush.msra.mxu0 0.0
          %1245 = vmatpush.msra.mxu0 0.0
          %1246 = vmatpush.msra.mxu0 0.0
          %1247 = vmatpush.msra.mxu0 0.0
          %1248 = vmatpush.msra.mxu0 0.0
          %1249 = vmatpush.msra.mxu0 0.0
          %1250 = vmatpush.msra.mxu0 0.0
          %1251 = vmatpush.msra.mxu0 0.0
          %1252 = vmatpush.msra.mxu0 0.0
          %1253 = vmatpush.msra.mxu0 0.0
          %1254 = vmatpush.msra.mxu0 0.0
          %1255 = vmatpush.msra.mxu0 %v1228
          %1256 = vmatpush.msra.mxu0 %v1220
          %1257 = vmatmul.f32.gmra.mxu0 %v1239
          %v1258 = vpop.f32.mrf.mxu0
          %v1259 = vadd.f32 0.0, %v1258
          %1260 = vdwg.mxu0
          %1261 = vmatpush.msra.mxu0 0.0
          %1262 = vmatpush.msra.mxu0 0.0
          %1263 = vmatpush.msra.mxu0 0.0
          %1264 = vmatpush.msra.mxu0 0.0
          %1265 = vmatpush.msra.mxu0 0.0
          %1266 = vmatpush.msra.mxu0 0.0
          %1267 = vmatpush.msra.mxu0 0.0
          %1268 = vmatpush.msra.mxu0 0.0
          %1269 = vmatpush.msra.mxu0 0.0
          %1270 = vmatpush.msra.mxu0 0.0
          %1271 = vmatpush.msra.mxu0 0.0
          %1272 = vmatpush.msra.mxu0 0.0
          %1273 = vmatpush.msra.mxu0 0.0
          %1274 = vmatpush.msra.mxu0 0.0
          %1275 = vmatpush.msra.mxu0 %v1229
          %1276 = vmatpush.msra.mxu0 %v1221
          %1277 = vmatmul.f32.gmra.mxu0 %v1239
          %v1278 = vpop.f32.mrf.mxu0
          %v1279 = vadd.f32 0.0, %v1278
          %1280 = vdwg.mxu0
          %1281 = vmatpush.msra.mxu0 0.0
          %1282 = vmatpush.msra.mxu0 0.0
          %1283 = vmatpush.msra.mxu0 0.0
          %1284 = vmatpush.msra.mxu0 0.0
          %1285 = vmatpush.msra.mxu0 0.0
          %1286 = vmatpush.msra.mxu0 0.0
          %1287 = vmatpush.msra.mxu0 0.0
          %1288 = vmatpush.msra.mxu0 0.0
          %1289 = vmatpush.msra.mxu0 0.0
          %1290 = vmatpush.msra.mxu0 0.0
          %1291 = vmatpush.msra.mxu0 0.0
          %1292 = vmatpush.msra.mxu0 0.0
          %1293 = vmatpush.msra.mxu0 0.0
          %1294 = vmatpush.msra.mxu0 0.0
          %1295 = vmatpush.msra.mxu0 %v1230
          %1296 = vmatpush.msra.mxu0 %v1222
          %1297 = vmatmul.f32.gmra.mxu0 %v1239
          %v1298 = vpop.f32.mrf.mxu0
          %v1299 = vadd.f32 0.0, %v1298
          %1300 = vdwg.mxu0
          %1301 = vmatpush.msra.mxu0 0.0
          %1302 = vmatpush.msra.mxu0 0.0
          %1303 = vmatpush.msra.mxu0 0.0
          %1304 = vmatpush.msra.mxu0 0.0
          %1305 = vmatpush.msra.mxu0 0.0
          %1306 = vmatpush.msra.mxu0 0.0
          %1307 = vmatpush.msra.mxu0 0.0
          %1308 = vmatpush.msra.mxu0 0.0
          %1309 = vmatpush.msra.mxu0 0.0
          %1310 = vmatpush.msra.mxu0 0.0
          %1311 = vmatpush.msra.mxu0 0.0
          %1312 = vmatpush.msra.mxu0 0.0
          %1313 = vmatpush.msra.mxu0 0.0
          %1314 = vmatpush.msra.mxu0 0.0
          %1315 = vmatpush.msra.mxu0 %v1231
          %1316 = vmatpush.msra.mxu0 %v1223
          %1317 = vmatmul.f32.gmra.mxu0 %v1239
          %v1318 = vpop.f32.mrf.mxu0
          %v1319 = vadd.f32 0.0, %v1318
          %1320 = vdwg.mxu0
          %1321 = vmatpush.msra.mxu0 0.0
          %1322 = vmatpush.msra.mxu0 0.0
          %1323 = vmatpush.msra.mxu0 0.0
          %1324 = vmatpush.msra.mxu0 0.0
          %1325 = vmatpush.msra.mxu0 0.0
          %1326 = vmatpush.msra.mxu0 0.0
          %1327 = vmatpush.msra.mxu0 0.0
          %1328 = vmatpush.msra.mxu0 0.0
          %1329 = vmatpush.msra.mxu0 0.0
          %1330 = vmatpush.msra.mxu0 0.0
          %1331 = vmatpush.msra.mxu0 0.0
          %1332 = vmatpush.msra.mxu0 0.0
          %1333 = vmatpush.msra.mxu0 0.0
          %1334 = vmatpush.msra.mxu0 0.0
          %1335 = vmatpush.msra.mxu0 %v1232
          %1336 = vmatpush.msra.mxu0 %v1224
          %1337 = vmatmul.f32.gmra.mxu0 %v1239
          %v1338 = vpop.f32.mrf.mxu0
          %v1339 = vadd.f32 0.0, %v1338
          %1340 = vdwg.mxu0
          %1341 = vmatpush.msra.mxu0 0.0
          %1342 = vmatpush.msra.mxu0 0.0
          %1343 = vmatpush.msra.mxu0 0.0
          %1344 = vmatpush.msra.mxu0 0.0
          %1345 = vmatpush.msra.mxu0 0.0
          %1346 = vmatpush.msra.mxu0 0.0
          %1347 = vmatpush.msra.mxu0 0.0
          %1348 = vmatpush.msra.mxu0 0.0
          %1349 = vmatpush.msra.mxu0 0.0
          %1350 = vmatpush.msra.mxu0 0.0
          %1351 = vmatpush.msra.mxu0 0.0
          %1352 = vmatpush.msra.mxu0 0.0
          %1353 = vmatpush.msra.mxu0 0.0
          %1354 = vmatpush.msra.mxu0 0.0
          %1355 = vmatpush.msra.mxu0 %v1233
          %1356 = vmatpush.msra.mxu0 %v1225
          %1357 = vmatmul.f32.gmra.mxu0 %v1239
          %v1358 = vpop.f32.mrf.mxu0
          %v1359 = vadd.f32 0.0, %v1358
          %1360 = vdwg.mxu0
          %1361 = vmatpush.msra.mxu0 0.0
          %1362 = vmatpush.msra.mxu0 0.0
          %1363 = vmatpush.msra.mxu0 0.0
          %1364 = vmatpush.msra.mxu0 0.0
          %1365 = vmatpush.msra.mxu0 0.0
          %1366 = vmatpush.msra.mxu0 0.0
          %1367 = vmatpush.msra.mxu0 0.0
          %1368 = vmatpush.msra.mxu0 0.0
          %1369 = vmatpush.msra.mxu0 0.0
          %1370 = vmatpush.msra.mxu0 0.0
          %1371 = vmatpush.msra.mxu0 0.0
          %1372 = vmatpush.msra.mxu0 0.0
          %1373 = vmatpush.msra.mxu0 0.0
          %1374 = vmatpush.msra.mxu0 0.0
          %1375 = vmatpush.msra.mxu0 %v1234
          %1376 = vmatpush.msra.mxu0 %v1226
          %1377 = vmatmul.f32.gmra.mxu0 %v1239
          %v1378 = vpop.f32.mrf.mxu0
          %v1379 = vadd.f32 0.0, %v1378
          %1380 = vdwg.mxu0
          %1381 = vmatpush.msra.mxu0 0.0
          %1382 = vmatpush.msra.mxu0 0.0
          %1383 = vmatpush.msra.mxu0 0.0
          %1384 = vmatpush.msra.mxu0 0.0
          %1385 = vmatpush.msra.mxu0 0.0
          %1386 = vmatpush.msra.mxu0 0.0
          %1387 = vmatpush.msra.mxu0 0.0
          %1388 = vmatpush.msra.mxu0 0.0
          %1389 = vmatpush.msra.mxu0 0.0
          %1390 = vmatpush.msra.mxu0 0.0
          %1391 = vmatpush.msra.mxu0 0.0
          %1392 = vmatpush.msra.mxu0 0.0
          %1393 = vmatpush.msra.mxu0 0.0
          %1394 = vmatpush.msra.mxu0 0.0
          %1395 = vmatpush.msra.mxu0 %v1235
          %1396 = vmatpush.msra.mxu0 %v1227
          %1397 = vmatmul.f32.gmra.mxu0 %v1239
          %v1398 = vpop.f32.mrf.mxu0
          %v1399 = vadd.f32 0.0, %v1398
          %1400 = vdwg.mxu0
          %v1401 = vmul.f32 %v1259, %v1069
          %v1402 = vmul.f32 %v1279, %v1070
          %v1403 = vmul.f32 %v1299, %v1071
          %v1404 = vmul.f32 %v1319, %v1072
          %v1405 = vmul.f32 %v1339, %v1073
          %v1406 = vmul.f32 %v1359, %v1074
          %v1407 = vmul.f32 %v1379, %v1075
          %v1408 = vmul.f32 %v1399, %v1076
          %v1409 = vld [vmem:[#allocation4] sm:$0xff]
          %v1410 = vadd.f32 %v1401, %v1402
          %v1411 = vadd.f32 %v1410, %v1403
          %v1412 = vadd.f32 %v1411, %v1404
          %v1413 = vadd.f32 %v1412, %v1405
          %v1414 = vadd.f32 %v1413, %v1406
          %v1415 = vadd.f32 %v1414, %v1407
          %v1416 = vadd.f32 %v1415, %v1408
          %1417 = vadd.xlane.f32.xlu0 %v1416
          %v1418 = vpop.xlane.xlu0 %1417
          %v1419 = vadd.f32 %v1409, %v1418
          %vm1420 = vcmask 7168
          %1421 = vst.msk [vmem:[#allocation4] sm:$0xff] %vm1420, %v1419
          %v1422 = vld [vmem:[#allocation5] sm:$0xff]
          %v1423 = vmul.f32 %v1401, %v1401
          %v1424 = vmul.f32 %v1402, %v1402
          %v1425 = vmul.f32 %v1403, %v1403
          %v1426 = vmul.f32 %v1404, %v1404
          %v1427 = vmul.f32 %v1405, %v1405
          %v1428 = vmul.f32 %v1406, %v1406
          %v1429 = vmul.f32 %v1407, %v1407
          %v1430 = vmul.f32 %v1408, %v1408
          %v1431 = vadd.f32 %v1423, %v1424
          %v1432 = vadd.f32 %v1431, %v1425
          %v1433 = vadd.f32 %v1432, %v1426
          %v1434 = vadd.f32 %v1433, %v1427
          %v1435 = vadd.f32 %v1434, %v1428
          %v1436 = vadd.f32 %v1435, %v1429
          %v1437 = vadd.f32 %v1436, %v1430
          %1438 = vadd.xlane.f32.xlu0 %v1437
          %v1439 = vpop.xlane.xlu0 %1438
          %v1440 = vadd.f32 %v1422, %v1439
          %1441 = vst.msk [vmem:[#allocation5] sm:$0xff] %vm1420, %v1440
        $region80: #{tpu_custom_call.1} parent=59 // pred_fallthru
          _
        // Predicated region
        $region81: #{tpu_custom_call.1} parent=59 // pred_check
          %p1442 = pneg %p436
        $region82: #{tpu_custom_call.1} parent=59 // pred_check_branch
          %1444 = sbr.rel (%p1442) target = $region84
        $region83: #{tpu_custom_call.1} parent=59 // pred_region
          %v1445 = vld [vmem:[#allocation6] sm:$0xff]
          %v1446 = vld [vmem:[#allocation6 + $0x8] sm:$0xff]
          %1448 = vset.pattern.permute.xlu0 0
          %1449 = vperm.xlu0 %1448, %v1445
          %v1450 = vpop.permute.xlu0 %1449
          %1453 = vset.pattern.permute.xlu0 0
          %1454 = vperm.xlu0 %1453, %v1446
          %v1455 = vpop.permute.xlu0 %1454
          %v1457 = vmul.f32 %v868, %v1450
          %v1458 = vmul.f32 %v891, %v1450
          %v1459 = vmul.f32 %v914, %v1450
          %v1460 = vmul.f32 %v937, %v1450
          %v1461 = vmul.f32 %v960, %v1450
          %v1462 = vmul.f32 %v983, %v1450
          %v1463 = vmul.f32 %v1006, %v1450
          %v1464 = vmul.f32 %v1029, %v1450
          %v1465 = vmul.f32 %v871, %v1455
          %v1466 = vmul.f32 %v894, %v1455
          %v1467 = vmul.f32 %v917, %v1455
          %v1468 = vmul.f32 %v940, %v1455
          %v1469 = vmul.f32 %v963, %v1455
          %v1470 = vmul.f32 %v986, %v1455
          %v1471 = vmul.f32 %v1009, %v1455
          %v1472 = vmul.f32 %v1032, %v1455
          %v1473 = vld [vmem:[#allocation7] sm:$0xff]
          %v1474 = vld [vmem:[#allocation7 + $0x8] sm:$0xff]
          %1476 = vset.pattern.permute.xlu0 0
          %1477 = vperm.xlu0 %1476, %v1473
          %v1478 = vpop.permute.xlu0 %1477
          %1481 = vset.pattern.permute.xlu0 0
          %1482 = vperm.xlu0 %1481, %v1474
          %v1483 = vpop.permute.xlu0 %1482
          %v1485 = vadd.f32 %v1457, %v1478
          %v1486 = vadd.f32 %v1458, %v1478
          %v1487 = vadd.f32 %v1459, %v1478
          %v1488 = vadd.f32 %v1460, %v1478
          %v1489 = vadd.f32 %v1461, %v1478
          %v1490 = vadd.f32 %v1462, %v1478
          %v1491 = vadd.f32 %v1463, %v1478
          %v1492 = vadd.f32 %v1464, %v1478
          %v1493 = vadd.f32 %v1465, %v1483
          %v1494 = vadd.f32 %v1466, %v1483
          %v1495 = vadd.f32 %v1467, %v1483
          %v1496 = vadd.f32 %v1468, %v1483
          %v1497 = vadd.f32 %v1469, %v1483
          %v1498 = vadd.f32 %v1470, %v1483
          %v1499 = vadd.f32 %v1471, %v1483
          %v1500 = vadd.f32 %v1472, %v1483
          %v1501 = vmax.f32 %v1485, 0.0
          %v1502 = vmax.f32 %v1486, 0.0
          %v1503 = vmax.f32 %v1487, 0.0
          %v1504 = vmax.f32 %v1488, 0.0
          %v1505 = vmax.f32 %v1489, 0.0
          %v1506 = vmax.f32 %v1490, 0.0
          %v1507 = vmax.f32 %v1491, 0.0
          %v1508 = vmax.f32 %v1492, 0.0
          %v1509 = vmax.f32 %v1493, 0.0
          %v1510 = vmax.f32 %v1494, 0.0
          %v1511 = vmax.f32 %v1495, 0.0
          %v1512 = vmax.f32 %v1496, 0.0
          %v1513 = vmax.f32 %v1497, 0.0
          %v1514 = vmax.f32 %v1498, 0.0
          %v1515 = vmax.f32 %v1499, 0.0
          %v1516 = vmax.f32 %v1500, 0.0
          %v1517 = vld [vmem:[%s3] sm:$0xff]
          %vm1518 = vcmask 130048
          %v1520 = vsel %vm1518, %v1517, 0
          %1522 = vmatpush.msra.mxu0 0.0
          %1523 = vmatpush.msra.mxu0 0.0
          %1524 = vmatpush.msra.mxu0 0.0
          %1525 = vmatpush.msra.mxu0 0.0
          %1526 = vmatpush.msra.mxu0 0.0
          %1527 = vmatpush.msra.mxu0 0.0
          %1528 = vmatpush.msra.mxu0 0.0
          %1529 = vmatpush.msra.mxu0 0.0
          %1530 = vmatpush.msra.mxu0 0.0
          %1531 = vmatpush.msra.mxu0 0.0
          %1532 = vmatpush.msra.mxu0 0.0
          %1533 = vmatpush.msra.mxu0 0.0
          %1534 = vmatpush.msra.mxu0 0.0
          %1535 = vmatpush.msra.mxu0 0.0
          %1536 = vmatpush.msra.mxu0 %v1509
          %1537 = vmatpush.msra.mxu0 %v1501
          %1538 = vmatmul.f32.gmra.mxu0 %v1520
          %v1539 = vpop.f32.mrf.mxu0
          %v1540 = vadd.f32 0.0, %v1539
          %1541 = vdwg.mxu0
          %1542 = vmatpush.msra.mxu0 0.0
          %1543 = vmatpush.msra.mxu0 0.0
          %1544 = vmatpush.msra.mxu0 0.0
          %1545 = vmatpush.msra.mxu0 0.0
          %1546 = vmatpush.msra.mxu0 0.0
          %1547 = vmatpush.msra.mxu0 0.0
          %1548 = vmatpush.msra.mxu0 0.0
          %1549 = vmatpush.msra.mxu0 0.0
          %1550 = vmatpush.msra.mxu0 0.0
          %1551 = vmatpush.msra.mxu0 0.0
          %1552 = vmatpush.msra.mxu0 0.0
          %1553 = vmatpush.msra.mxu0 0.0
          %1554 = vmatpush.msra.mxu0 0.0
          %1555 = vmatpush.msra.mxu0 0.0
          %1556 = vmatpush.msra.mxu0 %v1510
          %1557 = vmatpush.msra.mxu0 %v1502
          %1558 = vmatmul.f32.gmra.mxu0 %v1520
          %v1559 = vpop.f32.mrf.mxu0
          %v1560 = vadd.f32 0.0, %v1559
          %1561 = vdwg.mxu0
          %1562 = vmatpush.msra.mxu0 0.0
          %1563 = vmatpush.msra.mxu0 0.0
          %1564 = vmatpush.msra.mxu0 0.0
          %1565 = vmatpush.msra.mxu0 0.0
          %1566 = vmatpush.msra.mxu0 0.0
          %1567 = vmatpush.msra.mxu0 0.0
          %1568 = vmatpush.msra.mxu0 0.0
          %1569 = vmatpush.msra.mxu0 0.0
          %1570 = vmatpush.msra.mxu0 0.0
          %1571 = vmatpush.msra.mxu0 0.0
          %1572 = vmatpush.msra.mxu0 0.0
          %1573 = vmatpush.msra.mxu0 0.0
          %1574 = vmatpush.msra.mxu0 0.0
          %1575 = vmatpush.msra.mxu0 0.0
          %1576 = vmatpush.msra.mxu0 %v1511
          %1577 = vmatpush.msra.mxu0 %v1503
          %1578 = vmatmul.f32.gmra.mxu0 %v1520
          %v1579 = vpop.f32.mrf.mxu0
          %v1580 = vadd.f32 0.0, %v1579
          %1581 = vdwg.mxu0
          %1582 = vmatpush.msra.mxu0 0.0
          %1583 = vmatpush.msra.mxu0 0.0
          %1584 = vmatpush.msra.mxu0 0.0
          %1585 = vmatpush.msra.mxu0 0.0
          %1586 = vmatpush.msra.mxu0 0.0
          %1587 = vmatpush.msra.mxu0 0.0
          %1588 = vmatpush.msra.mxu0 0.0
          %1589 = vmatpush.msra.mxu0 0.0
          %1590 = vmatpush.msra.mxu0 0.0
          %1591 = vmatpush.msra.mxu0 0.0
          %1592 = vmatpush.msra.mxu0 0.0
          %1593 = vmatpush.msra.mxu0 0.0
          %1594 = vmatpush.msra.mxu0 0.0
          %1595 = vmatpush.msra.mxu0 0.0
          %1596 = vmatpush.msra.mxu0 %v1512
          %1597 = vmatpush.msra.mxu0 %v1504
          %1598 = vmatmul.f32.gmra.mxu0 %v1520
          %v1599 = vpop.f32.mrf.mxu0
          %v1600 = vadd.f32 0.0, %v1599
          %1601 = vdwg.mxu0
          %1602 = vmatpush.msra.mxu0 0.0
          %1603 = vmatpush.msra.mxu0 0.0
          %1604 = vmatpush.msra.mxu0 0.0
          %1605 = vmatpush.msra.mxu0 0.0
          %1606 = vmatpush.msra.mxu0 0.0
          %1607 = vmatpush.msra.mxu0 0.0
          %1608 = vmatpush.msra.mxu0 0.0
          %1609 = vmatpush.msra.mxu0 0.0
          %1610 = vmatpush.msra.mxu0 0.0
          %1611 = vmatpush.msra.mxu0 0.0
          %1612 = vmatpush.msra.mxu0 0.0
          %1613 = vmatpush.msra.mxu0 0.0
          %1614 = vmatpush.msra.mxu0 0.0
          %1615 = vmatpush.msra.mxu0 0.0
          %1616 = vmatpush.msra.mxu0 %v1513
          %1617 = vmatpush.msra.mxu0 %v1505
          %1618 = vmatmul.f32.gmra.mxu0 %v1520
          %v1619 = vpop.f32.mrf.mxu0
          %v1620 = vadd.f32 0.0, %v1619
          %1621 = vdwg.mxu0
          %1622 = vmatpush.msra.mxu0 0.0
          %1623 = vmatpush.msra.mxu0 0.0
          %1624 = vmatpush.msra.mxu0 0.0
          %1625 = vmatpush.msra.mxu0 0.0
          %1626 = vmatpush.msra.mxu0 0.0
          %1627 = vmatpush.msra.mxu0 0.0
          %1628 = vmatpush.msra.mxu0 0.0
          %1629 = vmatpush.msra.mxu0 0.0
          %1630 = vmatpush.msra.mxu0 0.0
          %1631 = vmatpush.msra.mxu0 0.0
          %1632 = vmatpush.msra.mxu0 0.0
          %1633 = vmatpush.msra.mxu0 0.0
          %1634 = vmatpush.msra.mxu0 0.0
          %1635 = vmatpush.msra.mxu0 0.0
          %1636 = vmatpush.msra.mxu0 %v1514
          %1637 = vmatpush.msra.mxu0 %v1506
          %1638 = vmatmul.f32.gmra.mxu0 %v1520
          %v1639 = vpop.f32.mrf.mxu0
          %v1640 = vadd.f32 0.0, %v1639
          %1641 = vdwg.mxu0
          %1642 = vmatpush.msra.mxu0 0.0
          %1643 = vmatpush.msra.mxu0 0.0
          %1644 = vmatpush.msra.mxu0 0.0
          %1645 = vmatpush.msra.mxu0 0.0
          %1646 = vmatpush.msra.mxu0 0.0
          %1647 = vmatpush.msra.mxu0 0.0
          %1648 = vmatpush.msra.mxu0 0.0
          %1649 = vmatpush.msra.mxu0 0.0
          %1650 = vmatpush.msra.mxu0 0.0
          %1651 = vmatpush.msra.mxu0 0.0
          %1652 = vmatpush.msra.mxu0 0.0
          %1653 = vmatpush.msra.mxu0 0.0
          %1654 = vmatpush.msra.mxu0 0.0
          %1655 = vmatpush.msra.mxu0 0.0
          %1656 = vmatpush.msra.mxu0 %v1515
          %1657 = vmatpush.msra.mxu0 %v1507
          %1658 = vmatmul.f32.gmra.mxu0 %v1520
          %v1659 = vpop.f32.mrf.mxu0
          %v1660 = vadd.f32 0.0, %v1659
          %1661 = vdwg.mxu0
          %1662 = vmatpush.msra.mxu0 0.0
          %1663 = vmatpush.msra.mxu0 0.0
          %1664 = vmatpush.msra.mxu0 0.0
          %1665 = vmatpush.msra.mxu0 0.0
          %1666 = vmatpush.msra.mxu0 0.0
          %1667 = vmatpush.msra.mxu0 0.0
          %1668 = vmatpush.msra.mxu0 0.0
          %1669 = vmatpush.msra.mxu0 0.0
          %1670 = vmatpush.msra.mxu0 0.0
          %1671 = vmatpush.msra.mxu0 0.0
          %1672 = vmatpush.msra.mxu0 0.0
          %1673 = vmatpush.msra.mxu0 0.0
          %1674 = vmatpush.msra.mxu0 0.0
          %1675 = vmatpush.msra.mxu0 0.0
          %1676 = vmatpush.msra.mxu0 %v1516
          %1677 = vmatpush.msra.mxu0 %v1508
          %1678 = vmatmul.f32.gmra.mxu0 %v1520
          %v1679 = vpop.f32.mrf.mxu0
          %v1680 = vadd.f32 0.0, %v1679
          %1681 = vdwg.mxu0
          %v1682 = vld [vmem:[#allocation8] sm:$0xff]
          %1684 = vset.pattern.permute.xlu0 0
          %1685 = vperm.xlu0 %1684, %v1682
          %v1686 = vpop.permute.xlu0 %1685
          %v1688 = vmul.f32 %v1540, %v1686
          %v1689 = vmul.f32 %v1560, %v1686
          %v1690 = vmul.f32 %v1580, %v1686
          %v1691 = vmul.f32 %v1600, %v1686
          %v1692 = vmul.f32 %v1620, %v1686
          %v1693 = vmul.f32 %v1640, %v1686
          %v1694 = vmul.f32 %v1660, %v1686
          %v1695 = vmul.f32 %v1680, %v1686
          %v1696 = vld [vmem:[#allocation9] sm:$0xff]
          %1698 = vset.pattern.permute.xlu0 0
          %1699 = vperm.xlu0 %1698, %v1696
          %v1700 = vpop.permute.xlu0 %1699
          %v1702 = vadd.f32 %v1688, %v1700
          %v1703 = vadd.f32 %v1689, %v1700
          %v1704 = vadd.f32 %v1690, %v1700
          %v1705 = vadd.f32 %v1691, %v1700
          %v1706 = vadd.f32 %v1692, %v1700
          %v1707 = vadd.f32 %v1693, %v1700
          %v1708 = vadd.f32 %v1694, %v1700
          %v1709 = vadd.f32 %v1695, %v1700
          %v1710 = vmax.f32 %v1702, 0.0
          %v1711 = vmax.f32 %v1703, 0.0
          %v1712 = vmax.f32 %v1704, 0.0
          %v1713 = vmax.f32 %v1705, 0.0
          %v1714 = vmax.f32 %v1706, 0.0
          %v1715 = vmax.f32 %v1707, 0.0
          %v1716 = vmax.f32 %v1708, 0.0
          %v1717 = vmax.f32 %v1709, 0.0
          %v1718 = vld [vmem:[%s8] sm:$0xff]
          %1720 = vset.pattern.permute.xlu0 0
          %1721 = vperm.xlu0 %1720, %v1718
          %v1722 = vpop.permute.xlu0 %1721
          %v1724 = vmul.f32 %v1710, %v1722
          %v1725 = vmul.f32 %v1711, %v1722
          %v1726 = vmul.f32 %v1712, %v1722
          %v1727 = vmul.f32 %v1713, %v1722
          %v1728 = vmul.f32 %v1714, %v1722
          %v1729 = vmul.f32 %v1715, %v1722
          %v1730 = vmul.f32 %v1716, %v1722
          %v1731 = vmul.f32 %v1717, %v1722
          %v1732 = vrot.slane %v1724, 4
          %v1733 = vadd.f32 %v1724, %v1732
          %v1734 = vrot.slane %v1733, 2
          %v1735 = vadd.f32 %v1733, %v1734
          %v1736 = vrot.slane %v1735, 1
          %v1737 = vadd.f32 %v1735, %v1736
          %v1738 = vrot.slane %v1725, 4
          %v1739 = vadd.f32 %v1725, %v1738
          %v1740 = vrot.slane %v1739, 2
          %v1741 = vadd.f32 %v1739, %v1740
          %v1742 = vrot.slane %v1741, 1
          %v1743 = vadd.f32 %v1741, %v1742
          %v1744 = vrot.slane %v1726, 4
          %v1745 = vadd.f32 %v1726, %v1744
          %v1746 = vrot.slane %v1745, 2
          %v1747 = vadd.f32 %v1745, %v1746
          %v1748 = vrot.slane %v1747, 1
          %v1749 = vadd.f32 %v1747, %v1748
          %v1750 = vrot.slane %v1727, 4
          %v1751 = vadd.f32 %v1727, %v1750
          %v1752 = vrot.slane %v1751, 2
          %v1753 = vadd.f32 %v1751, %v1752
          %v1754 = vrot.slane %v1753, 1
          %v1755 = vadd.f32 %v1753, %v1754
          %v1756 = vrot.slane %v1728, 4
          %v1757 = vadd.f32 %v1728, %v1756
          %v1758 = vrot.slane %v1757, 2
          %v1759 = vadd.f32 %v1757, %v1758
          %v1760 = vrot.slane %v1759, 1
          %v1761 = vadd.f32 %v1759, %v1760
          %v1762 = vrot.slane %v1729, 4
          %v1763 = vadd.f32 %v1729, %v1762
          %v1764 = vrot.slane %v1763, 2
          %v1765 = vadd.f32 %v1763, %v1764
          %v1766 = vrot.slane %v1765, 1
          %v1767 = vadd.f32 %v1765, %v1766
          %v1768 = vrot.slane %v1730, 4
          %v1769 = vadd.f32 %v1730, %v1768
          %v1770 = vrot.slane %v1769, 2
          %v1771 = vadd.f32 %v1769, %v1770
          %v1772 = vrot.slane %v1771, 1
          %v1773 = vadd.f32 %v1771, %v1772
          %v1774 = vrot.slane %v1731, 4
          %v1775 = vadd.f32 %v1731, %v1774
          %v1776 = vrot.slane %v1775, 2
          %v1777 = vadd.f32 %v1775, %v1776
          %v1778 = vrot.slane %v1777, 1
          %v1779 = vadd.f32 %v1777, %v1778
          %v1780 = vld [vmem:[#allocation10] sm:$0x1]
          %1782 = vset.pattern.permute.xlu0 0
          %1783 = vperm.xlu0 %1782, %v1780
          %v1784 = vpop.permute.xlu0 %1783
          %v1786 = vperm.slane %v1784, 0
          %v1787 = vadd.f32 %v1737, %v1786
          %v1788 = vadd.f32 %v1743, %v1786
          %v1789 = vadd.f32 %v1749, %v1786
          %v1790 = vadd.f32 %v1755, %v1786
          %v1791 = vadd.f32 %v1761, %v1786
          %v1792 = vadd.f32 %v1767, %v1786
          %v1793 = vadd.f32 %v1773, %v1786
          %v1794 = vadd.f32 %v1779, %v1786
          %v1795 = vxor.u32 %v1787, 2147483648
          %v1796 = vxor.u32 %v1788, 2147483648
          %v1797 = vxor.u32 %v1789, 2147483648
          %v1798 = vxor.u32 %v1790, 2147483648
          %v1799 = vxor.u32 %v1791, 2147483648
          %v1800 = vxor.u32 %v1792, 2147483648
          %v1801 = vxor.u32 %v1793, 2147483648
          %v1802 = vxor.u32 %v1794, 2147483648
          %v1803 = vmul.f32 %v1795, 1.442695
          %v1804 = vpow.pop %v1803
          %v1805 = vmul.f32 %v1796, 1.442695
          %v1806 = vpow.pop %v1805
          %v1807 = vmul.f32 %v1797, 1.442695
          %v1808 = vpow.pop %v1807
          %v1809 = vmul.f32 %v1798, 1.442695
          %v1810 = vpow.pop %v1809
          %v1811 = vmul.f32 %v1799, 1.442695
          %v1812 = vpow.pop %v1811
          %v1813 = vmul.f32 %v1800, 1.442695
          %v1814 = vpow.pop %v1813
          %v1815 = vmul.f32 %v1801, 1.442695
          %v1816 = vpow.pop %v1815
          %v1817 = vmul.f32 %v1802, 1.442695
          %v1818 = vpow.pop %v1817
          %v1819 = vadd.f32 %v1804, 1.0
          %v1820 = vadd.f32 %v1806, 1.0
          %v1821 = vadd.f32 %v1808, 1.0
          %v1822 = vadd.f32 %v1810, 1.0
          %v1823 = vadd.f32 %v1812, 1.0
          %v1824 = vadd.f32 %v1814, 1.0
          %v1825 = vadd.f32 %v1816, 1.0
          %v1826 = vadd.f32 %v1818, 1.0
          %v1827 = vrcp.pop %v1819
          %v1828 = vmul.f32 %v1819, %v1827
          %v1829 = vsub.f32 1.0, %v1828
          %v1830 = vmul.f32 %v1827, %v1829
          %v1831 = vadd.f32 %v1827, %v1830
          %vm1832 = vweird.f32 %v1819
          %vm1833 = vweird.f32 %v1827
          %vm1834 = vmor %vm1832, %vm1833
          %v1835 = vsel %vm1834, %v1827, %v1831
          %v1836 = vand.u32 2147483647, %v1819
          %vm1837 = vcmp.eq.f32.partialorder %v1836, 8.507059e+37
          %v1838 = vand.u32 %v1819, 2147483648
          %v1839 = vor.u32 1.1754944e-38, %v1838
          %v1840 = vsel %vm1837, %v1839, %v1835
          %v1841 = vmul.f32 1.0, %v1840
          %v1842 = vrcp.pop %v1820
          %v1843 = vmul.f32 %v1820, %v1842
          %v1844 = vsub.f32 1.0, %v1843
          %v1845 = vmul.f32 %v1842, %v1844
          %v1846 = vadd.f32 %v1842, %v1845
          %vm1847 = vweird.f32 %v1820
          %vm1848 = vweird.f32 %v1842
          %vm1849 = vmor %vm1847, %vm1848
          %v1850 = vsel %vm1849, %v1842, %v1846
          %v1851 = vand.u32 2147483647, %v1820
          %vm1852 = vcmp.eq.f32.partialorder %v1851, 8.507059e+37
          %v1853 = vand.u32 %v1820, 2147483648
          %v1854 = vor.u32 1.1754944e-38, %v1853
          %v1855 = vsel %vm1852, %v1854, %v1850
          %v1856 = vmul.f32 1.0, %v1855
          %v1857 = vrcp.pop %v1821
          %v1858 = vmul.f32 %v1821, %v1857
          %v1859 = vsub.f32 1.0, %v1858
          %v1860 = vmul.f32 %v1857, %v1859
          %v1861 = vadd.f32 %v1857, %v1860
          %vm1862 = vweird.f32 %v1821
          %vm1863 = vweird.f32 %v1857
          %vm1864 = vmor %vm1862, %vm1863
          %v1865 = vsel %vm1864, %v1857, %v1861
          %v1866 = vand.u32 2147483647, %v1821
          %vm1867 = vcmp.eq.f32.partialorder %v1866, 8.507059e+37
          %v1868 = vand.u32 %v1821, 2147483648
          %v1869 = vor.u32 1.1754944e-38, %v1868
          %v1870 = vsel %vm1867, %v1869, %v1865
          %v1871 = vmul.f32 1.0, %v1870
          %v1872 = vrcp.pop %v1822
          %v1873 = vmul.f32 %v1822, %v1872
          %v1874 = vsub.f32 1.0, %v1873
          %v1875 = vmul.f32 %v1872, %v1874
          %v1876 = vadd.f32 %v1872, %v1875
          %vm1877 = vweird.f32 %v1822
          %vm1878 = vweird.f32 %v1872
          %vm1879 = vmor %vm1877, %vm1878
          %v1880 = vsel %vm1879, %v1872, %v1876
          %v1881 = vand.u32 2147483647, %v1822
          %vm1882 = vcmp.eq.f32.partialorder %v1881, 8.507059e+37
          %v1883 = vand.u32 %v1822, 2147483648
          %v1884 = vor.u32 1.1754944e-38, %v1883
          %v1885 = vsel %vm1882, %v1884, %v1880
          %v1886 = vmul.f32 1.0, %v1885
          %v1887 = vrcp.pop %v1823
          %v1888 = vmul.f32 %v1823, %v1887
          %v1889 = vsub.f32 1.0, %v1888
          %v1890 = vmul.f32 %v1887, %v1889
          %v1891 = vadd.f32 %v1887, %v1890
          %vm1892 = vweird.f32 %v1823
          %vm1893 = vweird.f32 %v1887
          %vm1894 = vmor %vm1892, %vm1893
          %v1895 = vsel %vm1894, %v1887, %v1891
          %v1896 = vand.u32 2147483647, %v1823
          %vm1897 = vcmp.eq.f32.partialorder %v1896, 8.507059e+37
          %v1898 = vand.u32 %v1823, 2147483648
          %v1899 = vor.u32 1.1754944e-38, %v1898
          %v1900 = vsel %vm1897, %v1899, %v1895
          %v1901 = vmul.f32 1.0, %v1900
          %v1902 = vrcp.pop %v1824
          %v1903 = vmul.f32 %v1824, %v1902
          %v1904 = vsub.f32 1.0, %v1903
          %v1905 = vmul.f32 %v1902, %v1904
          %v1906 = vadd.f32 %v1902, %v1905
          %vm1907 = vweird.f32 %v1824
          %vm1908 = vweird.f32 %v1902
          %vm1909 = vmor %vm1907, %vm1908
          %v1910 = vsel %vm1909, %v1902, %v1906
          %v1911 = vand.u32 2147483647, %v1824
          %vm1912 = vcmp.eq.f32.partialorder %v1911, 8.507059e+37
          %v1913 = vand.u32 %v1824, 2147483648
          %v1914 = vor.u32 1.1754944e-38, %v1913
          %v1915 = vsel %vm1912, %v1914, %v1910
          %v1916 = vmul.f32 1.0, %v1915
          %v1917 = vrcp.pop %v1825
          %v1918 = vmul.f32 %v1825, %v1917
          %v1919 = vsub.f32 1.0, %v1918
          %v1920 = vmul.f32 %v1917, %v1919
          %v1921 = vadd.f32 %v1917, %v1920
          %vm1922 = vweird.f32 %v1825
          %vm1923 = vweird.f32 %v1917
          %vm1924 = vmor %vm1922, %vm1923
          %v1925 = vsel %vm1924, %v1917, %v1921
          %v1926 = vand.u32 2147483647, %v1825
          %vm1927 = vcmp.eq.f32.partialorder %v1926, 8.507059e+37
          %v1928 = vand.u32 %v1825, 2147483648
          %v1929 = vor.u32 1.1754944e-38, %v1928
          %v1930 = vsel %vm1927, %v1929, %v1925
          %v1931 = vmul.f32 1.0, %v1930
          %v1932 = vrcp.pop %v1826
          %v1933 = vmul.f32 %v1826, %v1932
          %v1934 = vsub.f32 1.0, %v1933
          %v1935 = vmul.f32 %v1932, %v1934
          %v1936 = vadd.f32 %v1932, %v1935
          %vm1937 = vweird.f32 %v1826
          %vm1938 = vweird.f32 %v1932
          %vm1939 = vmor %vm1937, %vm1938
          %v1940 = vsel %vm1939, %v1932, %v1936
          %v1941 = vand.u32 2147483647, %v1826
          %vm1942 = vcmp.eq.f32.partialorder %v1941, 8.507059e+37
          %v1943 = vand.u32 %v1826, 2147483648
          %v1944 = vor.u32 1.1754944e-38, %v1943
          %v1945 = vsel %vm1942, %v1944, %v1940
          %v1946 = vmul.f32 1.0, %v1945
          %v1955 = vrot.slane %v1856, 7
          %v1956 = vrot.slane %v1871, 6
          %v1957 = vrot.slane %v1886, 5
          %v1958 = vrot.slane %v1901, 4
          %v1959 = vrot.slane %v1916, 3
          %v1960 = vrot.slane %v1931, 2
          %v1961 = vrot.slane %v1946, 1
          %vm1962 = vcmask 1040384
          %v1963 = vsel %vm1962, %v1841, %v1955
          %vm1964 = vcmask 1042434
          %v1965 = vsel %vm1964, %v1956, %v1957
          %vm1966 = vcmask 1041408
          %v1967 = vsel %vm1966, %v1963, %v1965
          %vm1968 = vcmask 1044484
          %v1969 = vsel %vm1968, %v1958, %v1959
          %vm1970 = vcmask 1046534
          %v1971 = vsel %vm1970, %v1960, %v1961
          %vm1972 = vcmask 1045508
          %v1973 = vsel %vm1972, %v1969, %v1971
          %vm1974 = vcmask 1043456
          %v1975 = vsel %vm1974, %v1967, %v1973
          %1977 = vst [vmem:[#allocation11] sm:$0xff] %v1975
        $region84: #{tpu_custom_call.1} parent=59 // pred_fallthru
          _
        // Predicated region
        $region85: #{tpu_custom_call.1} parent=59 // pred_check
          %p1978 = pneg %p269
        $region86: #{tpu_custom_call.1} parent=59 // pred_check_branch
          %1980 = sbr.rel (%p1978) target = $region88
        $region87: #{tpu_custom_call.1} parent=59 // pred_region
          %1982 = vsyncadd [#allocation12], 0
          %s1983 = smul.addr %s29, 8
          %s1984 = scalar_lea.hbm %s10, %s1983
          %s1986 = sshll.u32 [#allocation11], 4
          %s1987 = int_to_ptr.vmem [resolvable:$true] %s1986
          %s1988 = sshll.u32 %s1984, 4
          %s1989 = int_to_ptr.hbm [resolvable:$true] %s1988
          %1991 = dma.vmem_to_hbm [thread:$0]  %s1987, 128, %s1989, [#allocation12]
        $region88: #{tpu_custom_call.1} parent=59 // pred_fallthru
          _
        // Predicated region
        $region89: #{tpu_custom_call.1} parent=59 // pred_check
          %p1992 = pneg %p269
        $region90: #{tpu_custom_call.1} parent=59 // pred_check_branch
          %1994 = sbr.rel (%p1992) target = $region92
        $region91: #{tpu_custom_call.1} parent=59 // pred_region
          %1996 = dma.done [#allocation12], 128
        $region92: #{tpu_custom_call.1} parent=59 // pred_fallthru
          _
      $region60: #{tpu_custom_call.1} parent=5 // pred_fallthru
        _
      %p1997 = scmp.le.s32.totalorder 2, %s19
      // Predicated region
      $region93: #{tpu_custom_call.1} parent=5 // pred_check
        %p1998 = pneg %p1997
      $region94: #{tpu_custom_call.1} parent=5 // pred_check_branch
        %2000 = sbr.rel (%p1998) target = $region96
      $region95: #{tpu_custom_call.1} parent=5 // pred_region
        %s2001 = ssub.s32 %s19, 2
      $region96: #{tpu_custom_call.1} parent=5 // pred_fallthru
        _
    $region6: #{tpu_custom_call.1} parent=1 // loop_footer
      %s23 = sadd.s32 1, %s19
    $region7: #{tpu_custom_call.1} parent=1 // loop_footer_branch
      %18 = sbr.rel target = $region3
    $region8: #{tpu_custom_call.1} parent=1 // loop_exit
      _
    %2002 = vsyncpa [#allocation12], 1
    %s2003 = scalar_lea.sflag [#allocation12], 1
    %2004 = vsyncpa %s2003, 1

</llo_original>
